<compile_context>
chip_gen: v5e
topology: v5e:2x2
jax: 0.10.0
libtpu: 0.0.40
codegen_flags: <defaults>
</compile_context>

<pallas_src>
import functools

import jax
import jax.numpy as jnp
from jax.experimental import pallas as pl
from jax.experimental.pallas import tpu as pltpu

EMBED_DIM = 768          # vit_base head.in_features
BOTTLENECK = 256         # bottleneck_feature
NUM_CLASSES = 10
NC_PAD = 128             # lane-dense classifier output width (sliced outside)
BN_EPS = 1e-5
PATCH = 8


def _round_up(x, m):
    return (x + m - 1) // m * m


# ---------------------------------------------------------------------------
# Fused kernel: patch-embed matmul -> Linear1 -> (finalize) BatchNorm -> Linear2
# grid = (B_pad // tile_b,)  — batch axis is "arbitrary" because the BN finalize
# on the last step consumes every tile's bottleneck activations.
# ---------------------------------------------------------------------------
def _transda_kernel(xbar_ref, wp_ref, bp_ref, w1_ref, b1_ref, gamma_ref,
                    beta_ref, w2_ref, b2_ref, feat_ref, cls_ref, h_all,
                    *, batch, tile_b):
    i = pl.program_id(0)

    # backbone stand-in: embed of the patch-mean (bf16 MXU inputs, f32 acc).
    emb = jnp.dot(xbar_ref[...], wp_ref[...],
                  preferred_element_type=jnp.float32) + bp_ref[...]     # [tb, 768]

    # bottleneck Linear(768 -> 256)
    h = jnp.dot(emb.astype(jnp.bfloat16), w1_ref[...],
                preferred_element_type=jnp.float32) + b1_ref[...]       # [tb, 256]

    row0 = pl.multiple_of(i * tile_b, tile_b)
    h_all[pl.ds(row0, tile_b), :] = h

    # finalize: full-batch BatchNorm1d (training mode, biased stats) + classifier.
    @pl.when(i == pl.num_programs(0) - 1)
    def _finalize():
        h_full = h_all[...]                                             # [B_pad, 256]
        b_pad = h_full.shape[0]
        if batch == b_pad:
            mu = jnp.mean(h_full, axis=0, keepdims=True)
            d = h_full - mu
            var = jnp.mean(d * d, axis=0, keepdims=True)
        else:
            # batch was zero-padded to a sublane/tile multiple: mask padded
            # rows out of the statistics (stats over the real rows only).
            rows = jax.lax.broadcasted_iota(jnp.int32, h_full.shape, 0)
            valid = (rows < batch).astype(jnp.float32)
            inv_n = 1.0 / float(batch)
            mu = jnp.sum(h_full * valid, axis=0, keepdims=True) * inv_n
            d = (h_full - mu) * valid
            var = jnp.sum(d * d, axis=0, keepdims=True) * inv_n

        h_bn = ((h_full - mu) * jax.lax.rsqrt(var + BN_EPS)
                * gamma_ref[...] + beta_ref[...])
        feat_ref[...] = h_bn.astype(feat_ref.dtype)

        logits = jnp.dot(h_bn.astype(jnp.bfloat16), w2_ref[...],
                         preferred_element_type=jnp.float32) + b2_ref[...]
        cls_ref[...] = logits.astype(cls_ref.dtype)


# ---------------------------------------------------------------------------
# Forward: glue (patchify + patch-mean, batch padding, bf16/pad of weights)
#          + one fused pallas_call.
# ---------------------------------------------------------------------------
def transda_forward(x_nchw, params, patch=PATCH, max_tile_b=128):
    B, C, H, W = x_nchw.shape
    ph, pw = H // patch, W // patch
    dp = C * patch * patch

    # glue: patchify NCHW, then commute the mean-over-patches before the embed.
    patches = (x_nchw.reshape(B, C, ph, patch, pw, patch)
               .transpose(0, 2, 4, 1, 3, 5)
               .reshape(B, ph * pw, dp))
    xbar = jnp.mean(patches, axis=1)                         # [B, dp] f32

    # pad batch to a sublane/tile multiple; pick the batch tile.
    tile_b = _round_up(B, 8) if B <= max_tile_b else max_tile_b
    b_pad = _round_up(B, tile_b)
    if b_pad != B:
        xbar = jnp.pad(xbar, ((0, b_pad - B), (0, 0)))
    xbar = xbar.astype(jnp.bfloat16)

    # weights: bf16 for MXU inputs; biases / BN affine stay f32.
    wp = params["w_patch"].astype(jnp.bfloat16)                               # [dp, 768]
    w1 = params["w1"].astype(jnp.bfloat16)                                    # [768, 256]
    w2 = jnp.pad(params["w2"],
                 ((0, 0), (0, NC_PAD - NUM_CLASSES))).astype(jnp.bfloat16)    # [256, 128]
    b2 = jnp.pad(params["b2"], ((0, 0), (0, NC_PAD - NUM_CLASSES)))           # [1, 128]

    resident = lambda i: (0, 0)
    kernel = functools.partial(_transda_kernel, batch=B, tile_b=tile_b)

    feat_full, cls_full = pl.pallas_call(
        kernel,
        out_shape=(
            jax.ShapeDtypeStruct((b_pad, BOTTLENECK), jnp.float32),
            jax.ShapeDtypeStruct((b_pad, NC_PAD), jnp.float32),
        ),
        grid=(b_pad // tile_b,),
        in_specs=[
            pl.BlockSpec((tile_b, dp), lambda i: (i, 0)),      # xbar batch tile
            pl.BlockSpec((dp, EMBED_DIM), resident),           # w_patch
            pl.BlockSpec((1, EMBED_DIM), resident),            # b_patch
            pl.BlockSpec((EMBED_DIM, BOTTLENECK), resident),   # w1
            pl.BlockSpec((1, BOTTLENECK), resident),           # b1
            pl.BlockSpec((1, BOTTLENECK), resident),           # bn_gamma
            pl.BlockSpec((1, BOTTLENECK), resident),           # bn_beta
            pl.BlockSpec((BOTTLENECK, NC_PAD), resident),      # w2 (lane-dense pad)
            pl.BlockSpec((1, NC_PAD), resident),               # b2 (lane-dense pad)
        ],
        out_specs=(
            pl.BlockSpec((b_pad, BOTTLENECK), resident),       # feature (resident)
            pl.BlockSpec((b_pad, NC_PAD), resident),           # logits  (resident)
        ),
        scratch_shapes=[pltpu.VMEM((b_pad, BOTTLENECK), jnp.float32)],
        compiler_params=pltpu.CompilerParams(
            # BN finalize needs every batch tile -> reduction-style axis
            # (cannot be megacore-parallel without per-tile-wrong statistics).
            dimension_semantics=("arbitrary",),
        ),
    )(xbar, wp, params["b_patch"], w1, params["b1"],
      params["bn_gamma"], params["bn_beta"], w2, b2)

    return feat_full[:B], cls_full[:B, :NUM_CLASSES]


# ---------------------------------------------------------------------------
# Deterministic parameters (PyTorch nn.Linear weight is [out, in]; we store the
# transpose so kernels compute x @ W^T + b).
# ---------------------------------------------------------------------------
def make_params(key, in_channels=3, patch=PATCH):
    dp = in_channels * patch * patch
    ks = jax.random.split(key, 6)
    w_patch_t = jax.random.normal(ks[0], (EMBED_DIM, dp), jnp.float32) * 0.02
    w1_t = jax.random.normal(ks[1], (BOTTLENECK, EMBED_DIM), jnp.float32) * 0.02
    w2_t = jax.random.normal(ks[2], (NUM_CLASSES, BOTTLENECK), jnp.float32) * 0.02
    return {
        "w_patch": jnp.transpose(w_patch_t),                       # [dp, 768]
        "b_patch": jax.random.normal(ks[3], (1, EMBED_DIM), jnp.float32) * 0.02,
        "w1": jnp.transpose(w1_t),                                 # [768, 256]
        "b1": jax.random.normal(ks[4], (1, BOTTLENECK), jnp.float32) * 0.02,
        "bn_gamma": jnp.ones((1, BOTTLENECK), jnp.float32),        # BN default init
        "bn_beta": jnp.zeros((1, BOTTLENECK), jnp.float32),
        "w2": jnp.transpose(w2_t),                                 # [256, NUM_CLASSES]
        "b2": jax.random.normal(ks[5], (1, NUM_CLASSES), jnp.float32) * 0.02,
    }


if __name__ == "__main__":
    key = jax.random.PRNGKey(0)
    k_x, k_p = jax.random.split(key)
    # small image consistent with an NCHW conv backbone input
    x = jax.random.normal(k_x, (2, 3, 16, 16), jnp.float32)
    params = make_params(k_p, in_channels=3, patch=PATCH)

    feat, cls = jax.jit(transda_forward)(x, params)
    jax.block_until_ready((feat, cls))

    assert feat.shape == (2, BOTTLENECK)
    assert cls.shape == (2, NUM_CLASSES)
    print("KERNEL_OK")
</pallas_src>

<mosaic_0001>
module attributes {stable_mosaic.version = 11 : i64} {
  func.func @_transda_kernel(%arg0: i32, %arg1: memref<8x192xbf16, #tpu.memory_space<vmem>>, %arg2: memref<192x768xbf16, #tpu.memory_space<vmem>>, %arg3: memref<1x768xf32, #tpu.memory_space<vmem>>, %arg4: memref<768x256xbf16, #tpu.memory_space<vmem>>, %arg5: memref<1x256xf32, #tpu.memory_space<vmem>>, %arg6: memref<1x256xf32, #tpu.memory_space<vmem>>, %arg7: memref<1x256xf32, #tpu.memory_space<vmem>>, %arg8: memref<256x128xbf16, #tpu.memory_space<vmem>>, %arg9: memref<1x128xf32, #tpu.memory_space<vmem>>, %arg10: memref<8x256xf32, #tpu.memory_space<vmem>>, %arg11: memref<8x128xf32, #tpu.memory_space<vmem>>, %arg12: memref<8x256xf32, #tpu.memory_space<vmem>>) attributes {dimension_semantics = [#tpu.dimension_semantics<arbitrary>], iteration_bounds = array<i64: 1>, scalar_prefetch = 0 : i64, scratch_operands = 1 : i64, tpu.core_type = #tpu.core_type<tc>, window_params = [{transform_indices = @transform_0, window_bounds = array<i64: 8, 192>}, {pipeline_mode = #tpu.pipeline_mode<synchronous>, transform_indices = @transform_1, window_bounds = array<i64: 192, 768>}, {pipeline_mode = #tpu.pipeline_mode<synchronous>, transform_indices = @transform_2, window_bounds = array<i64: 1, 768>}, {pipeline_mode = #tpu.pipeline_mode<synchronous>, transform_indices = @transform_3, window_bounds = array<i64: 768, 256>}, {pipeline_mode = #tpu.pipeline_mode<synchronous>, transform_indices = @transform_4, window_bounds = array<i64: 1, 256>}, {pipeline_mode = #tpu.pipeline_mode<synchronous>, transform_indices = @transform_5, window_bounds = array<i64: 1, 256>}, {pipeline_mode = #tpu.pipeline_mode<synchronous>, transform_indices = @transform_6, window_bounds = array<i64: 1, 256>}, {pipeline_mode = #tpu.pipeline_mode<synchronous>, transform_indices = @transform_7, window_bounds = array<i64: 256, 128>}, {pipeline_mode = #tpu.pipeline_mode<synchronous>, transform_indices = @transform_8, window_bounds = array<i64: 1, 128>}, {pipeline_mode = #tpu.pipeline_mode<synchronous>, transform_indices = @transform_9, window_bounds = array<i64: 8, 256>}, {pipeline_mode = #tpu.pipeline_mode<synchronous>, transform_indices = @transform_10, window_bounds = array<i64: 8, 128>}]} {
    %c0 = arith.constant 0 : index
    %c0_0 = arith.constant 0 : index
    %0 = vector.load %arg1[%c0, %c0_0] : memref<8x192xbf16, #tpu.memory_space<vmem>>, vector<8x192xbf16>
    %c0_1 = arith.constant 0 : index
    %c0_2 = arith.constant 0 : index
    %1 = vector.load %arg2[%c0_1, %c0_2] : memref<192x768xbf16, #tpu.memory_space<vmem>>, vector<192x768xbf16>
    %cst = arith.constant dense<0.000000e+00> : vector<8x768xf32>
    %2 = tpu.matmul %0, %1, %cst {dimension_numbers = #tpu.dot_dimension_numbers<[1], [0], [0], [1], [0, 0, 1, 1], [], []>} : vector<8x192xbf16>, vector<192x768xbf16>, vector<8x768xf32> -> vector<8x768xf32>
    %c0_3 = arith.constant 0 : index
    %c0_4 = arith.constant 0 : index
    %3 = vector.load %arg3[%c0_3, %c0_4] : memref<1x768xf32, #tpu.memory_space<vmem>>, vector<1x768xf32>
    %4 = vector.broadcast %3 : vector<1x768xf32> to vector<8x768xf32>
    %5 = arith.addf %2, %4 : vector<8x768xf32>
    %6 = arith.truncf %5 : vector<8x768xf32> to vector<8x768xbf16>
    %c0_5 = arith.constant 0 : index
    %c0_6 = arith.constant 0 : index
    %7 = vector.load %arg4[%c0_5, %c0_6] : memref<768x256xbf16, #tpu.memory_space<vmem>>, vector<768x256xbf16>
    %cst_7 = arith.constant dense<0.000000e+00> : vector<8x256xf32>
    %8 = tpu.matmul %6, %7, %cst_7 {dimension_numbers = #tpu.dot_dimension_numbers<[1], [0], [0], [1], [0, 0, 1, 1], [], []>} : vector<8x768xbf16>, vector<768x256xbf16>, vector<8x256xf32> -> vector<8x256xf32>
    %c0_8 = arith.constant 0 : index
    %c0_9 = arith.constant 0 : index
    %9 = vector.load %arg5[%c0_8, %c0_9] : memref<1x256xf32, #tpu.memory_space<vmem>>, vector<1x256xf32>
    %10 = vector.broadcast %9 : vector<1x256xf32> to vector<8x256xf32>
    %11 = arith.addf %8, %10 : vector<8x256xf32>
    %c8_i32 = arith.constant 8 : i32
    %12 = arith.muli %arg0, %c8_i32 : i32
    %13 = tpu.assume_multiple %12, 8 : i32
    %14 = arith.index_cast %13 : i32 to index
    %c0_10 = arith.constant 0 : index
    %15 = vector.load %arg12[%14, %c0_10] : memref<8x256xf32, #tpu.memory_space<vmem>>, vector<8x256xf32>
    tpu.vector_store %arg12[%14, %c0_10], %11 {strides = array<i32>} : memref<8x256xf32, #tpu.memory_space<vmem>>, vector<8x256xf32>,
    %c0_i32 = arith.constant 0 : i32
    %16 = arith.cmpi eq, %arg0, %c0_i32 : i32
    %17 = arith.extui %16 : i1 to i32
    %c0_i32_11 = arith.constant 0 : i32
    %18 = arith.cmpi ne, %17, %c0_i32_11 : i32
    scf.if %18 {
      %c0_12 = arith.constant 0 : index
      %c0_13 = arith.constant 0 : index
      %19 = vector.load %arg12[%c0_12, %c0_13] : memref<8x256xf32, #tpu.memory_space<vmem>>, vector<8x256xf32>
      %20 = tpu.iota {dimensions = array<i32: 0>} : vector<8x256xi32>
      %c2_i32 = arith.constant 2 : i32
      %21 = vector.broadcast %c2_i32 : i32 to vector<8x256xi32>
      %22 = arith.cmpi slt, %20, %21 : vector<8x256xi32>
      %23 = arith.extui %22 : vector<8x256xi1> to vector<8x256xi32>
      %24 = arith.sitofp %23 : vector<8x256xi32> to vector<8x256xf32>
      %25 = arith.mulf %19, %24 : vector<8x256xf32>
      %cst_14 = arith.constant dense<0.000000e+00> : vector<256xf32>
      %26 = vector.multi_reduction <add>, %25, %cst_14 [0] : vector<8x256xf32> to vector<256xf32>
      %27 = vector.shape_cast %26 : vector<256xf32> to vector<1x256xf32>
      %cst_15 = arith.constant 5.000000e-01 : f32
      %28 = vector.broadcast %cst_15 : f32 to vector<1x256xf32>
      %29 = arith.mulf %27, %28 : vector<1x256xf32>
      %30 = vector.broadcast %29 : vector<1x256xf32> to vector<8x256xf32>
      %31 = arith.subf %19, %30 : vector<8x256xf32>
      %32 = arith.mulf %31, %24 : vector<8x256xf32>
      %33 = arith.mulf %32, %32 : vector<8x256xf32>
      %cst_16 = arith.constant dense<0.000000e+00> : vector<256xf32>
      %34 = vector.multi_reduction <add>, %33, %cst_16 [0] : vector<8x256xf32> to vector<256xf32>
      %35 = vector.shape_cast %34 : vector<256xf32> to vector<1x256xf32>
      %cst_17 = arith.constant 5.000000e-01 : f32
      %36 = vector.broadcast %cst_17 : f32 to vector<1x256xf32>
      %37 = arith.mulf %35, %36 : vector<1x256xf32>
      %38 = vector.broadcast %29 : vector<1x256xf32> to vector<8x256xf32>
      %39 = arith.subf %19, %38 : vector<8x256xf32>
      %cst_18 = arith.constant 9.99999974E-6 : f32
      %40 = vector.broadcast %cst_18 : f32 to vector<1x256xf32>
      %41 = arith.addf %37, %40 : vector<1x256xf32>
      %42 = math.rsqrt %41 : vector<1x256xf32>
      %43 = vector.broadcast %42 : vector<1x256xf32> to vector<8x256xf32>
      %44 = arith.mulf %39, %43 : vector<8x256xf32>
      %c0_19 = arith.constant 0 : index
      %c0_20 = arith.constant 0 : index
      %45 = vector.load %arg6[%c0_19, %c0_20] : memref<1x256xf32, #tpu.memory_space<vmem>>, vector<1x256xf32>
      %46 = vector.broadcast %45 : vector<1x256xf32> to vector<8x256xf32>
      %47 = arith.mulf %44, %46 : vector<8x256xf32>
      %c0_21 = arith.constant 0 : index
      %c0_22 = arith.constant 0 : index
      %48 = vector.load %arg7[%c0_21, %c0_22] : memref<1x256xf32, #tpu.memory_space<vmem>>, vector<1x256xf32>
      %49 = vector.broadcast %48 : vector<1x256xf32> to vector<8x256xf32>
      %50 = arith.addf %47, %49 : vector<8x256xf32>
      %c0_23 = arith.constant 0 : index
      %c0_24 = arith.constant 0 : index
      %51 = vector.load %arg10[%c0_23, %c0_24] : memref<8x256xf32, #tpu.memory_space<vmem>>, vector<8x256xf32>
      tpu.vector_store %arg10[%c0_23, %c0_24], %50 {strides = array<i32>} : memref<8x256xf32, #tpu.memory_space<vmem>>, vector<8x256xf32>,
      %52 = arith.truncf %50 : vector<8x256xf32> to vector<8x256xbf16>
      %c0_25 = arith.constant 0 : index
      %c0_26 = arith.constant 0 : index
      %53 = vector.load %arg8[%c0_25, %c0_26] : memref<256x128xbf16, #tpu.memory_space<vmem>>, vector<256x128xbf16>
      %cst_27 = arith.constant dense<0.000000e+00> : vector<8x128xf32>
      %54 = tpu.matmul %52, %53, %cst_27 {dimension_numbers = #tpu.dot_dimension_numbers<[1], [0], [0], [1], [0, 0, 1, 1], [], []>} : vector<8x256xbf16>, vector<256x128xbf16>, vector<8x128xf32> -> vector<8x128xf32>
      %c0_28 = arith.constant 0 : index
      %c0_29 = arith.constant 0 : index
      %55 = vector.load %arg9[%c0_28, %c0_29] : memref<1x128xf32, #tpu.memory_space<vmem>>, vector<1x128xf32>
      %56 = vector.broadcast %55 : vector<1x128xf32> to vector<8x128xf32>
      %57 = arith.addf %54, %56 : vector<8x128xf32>
      %c0_30 = arith.constant 0 : index
      %c0_31 = arith.constant 0 : index
      %58 = vector.load %arg11[%c0_30, %c0_31] : memref<8x128xf32, #tpu.memory_space<vmem>>, vector<8x128xf32>
      tpu.vector_store %arg11[%c0_30, %c0_31], %57 {strides = array<i32>} : memref<8x128xf32, #tpu.memory_space<vmem>>, vector<8x128xf32>,
    } else {
    }
    return
  }
  func.func @transform_0(%arg0: i32) -> (i32, i32) {
    %c0_i32 = arith.constant 0 : i32
    %c0_i32_0 = arith.constant 0 : i32
    return %arg0, %c0_i32 : i32, i32
  }
  func.func @transform_1(%arg0: i32) -> (i32, i32) {
    %c0_i32 = arith.constant 0 : i32
    %c0_i32_0 = arith.constant 0 : i32
    %c0_i32_1 = arith.constant 0 : i32
    return %c0_i32, %c0_i32_0 : i32, i32
  }
  func.func @transform_2(%arg0: i32) -> (i32, i32) {
    %c0_i32 = arith.constant 0 : i32
    %c0_i32_0 = arith.constant 0 : i32
    %c0_i32_1 = arith.constant 0 : i32
    return %c0_i32, %c0_i32_0 : i32, i32
  }
  func.func @transform_3(%arg0: i32) -> (i32, i32) {
    %c0_i32 = arith.constant 0 : i32
    %c0_i32_0 = arith.constant 0 : i32
    %c0_i32_1 = arith.constant 0 : i32
    return %c0_i32, %c0_i32_0 : i32, i32
  }
  func.func @transform_4(%arg0: i32) -> (i32, i32) {
    %c0_i32 = arith.constant 0 : i32
    %c0_i32_0 = arith.constant 0 : i32
    %c0_i32_1 = arith.constant 0 : i32
    return %c0_i32, %c0_i32_0 : i32, i32
  }
  func.func @transform_5(%arg0: i32) -> (i32, i32) {
    %c0_i32 = arith.constant 0 : i32
    %c0_i32_0 = arith.constant 0 : i32
    %c0_i32_1 = arith.constant 0 : i32
    return %c0_i32, %c0_i32_0 : i32, i32
  }
  func.func @transform_6(%arg0: i32) -> (i32, i32) {
    %c0_i32 = arith.constant 0 : i32
    %c0_i32_0 = arith.constant 0 : i32
    %c0_i32_1 = arith.constant 0 : i32
    return %c0_i32, %c0_i32_0 : i32, i32
  }
  func.func @transform_7(%arg0: i32) -> (i32, i32) {
    %c0_i32 = arith.constant 0 : i32
    %c0_i32_0 = arith.constant 0 : i32
    %c0_i32_1 = arith.constant 0 : i32
    return %c0_i32, %c0_i32_0 : i32, i32
  }
  func.func @transform_8(%arg0: i32) -> (i32, i32) {
    %c0_i32 = arith.constant 0 : i32
    %c0_i32_0 = arith.constant 0 : i32
    %c0_i32_1 = arith.constant 0 : i32
    return %c0_i32, %c0_i32_0 : i32, i32
  }
  func.func @transform_9(%arg0: i32) -> (i32, i32) {
    %c0_i32 = arith.constant 0 : i32
    %c0_i32_0 = arith.constant 0 : i32
    %c0_i32_1 = arith.constant 0 : i32
    return %c0_i32, %c0_i32_0 : i32, i32
  }
  func.func @transform_10(%arg0: i32) -> (i32, i32) {
    %c0_i32 = arith.constant 0 : i32
    %c0_i32_0 = arith.constant 0 : i32
    %c0_i32_1 = arith.constant 0 : i32
    return %c0_i32, %c0_i32_0 : i32, i32
  }
}

</mosaic_0001>

<llo_original>
// kernel: transda_forward.1
$region0: #{transda_forward.1}
  #allocation0 [shape = 'u32[]', space=smem, size = 0x4, offset = 0x4, fixed_abs, tag = 'smem constant byte address 0x4 - core index']
  #allocation1 [shape = 'u32[72,128]{1,0:T(1,128)}', space=vmem, size = 0x9000, scoped, tag = 'internal scratch']
  #allocation2 [shape = 'f32[8,256]{1,0:T(8,128)}', space=vmem, size = 0x2000, scoped, tag = 'scratch operand']
  %s0 = inlined_call_operand.vmem [shape: bf16[8,192], index: 0, kind: input, shape index: {}]
  %s1 = inlined_call_operand.vmem [shape: bf16[192,768], index: 1, kind: input, shape index: {}]
  %s2 = inlined_call_operand.vmem [shape: f32[1,768], index: 2, kind: input, shape index: {}]
  %s3 = inlined_call_operand.vmem [shape: bf16[768,256], index: 3, kind: input, shape index: {}]
  %s4 = inlined_call_operand.vmem [shape: f32[1,256], index: 4, kind: input, shape index: {}]
  %s5 = inlined_call_operand.vmem [shape: f32[1,256], index: 5, kind: input, shape index: {}]
  %s6 = inlined_call_operand.vmem [shape: f32[1,256], index: 6, kind: input, shape index: {}]
  %s7 = inlined_call_operand.vmem [shape: bf16[256,128], index: 7, kind: input, shape index: {}]
  %s8 = inlined_call_operand.vmem [shape: f32[1,128], index: 8, kind: input, shape index: {}]
  %s9 = inlined_call_operand.vmem [shape: f32[8,256], index: 9, kind: output, shape index: {0}]
  %s10 = inlined_call_operand.vmem [shape: f32[8,128], index: 10, kind: output, shape index: {1}]
  %11 = xla_tuple %s9, %s10
  %s12 = sld [smem:[#allocation0]]
  $region58: #{transda_forward.1} parent=0
    _
  %s14 = ssub.s32 1, %s12
  %s15 = scalar_select 0, %s14, %s12
  // Predicated region
  $region2: #{transda_forward.1} parent=0 // pred_check
    _
  $region3: #{transda_forward.1} parent=0 // pred_check_branch
    %17 = sbr.rel (0) target = $region5
  $region4: #{transda_forward.1} parent=0 // pred_region
    _
  $region5: #{transda_forward.1} parent=0 // pred_fallthru
    _
  // Predicated region
  $region6: #{transda_forward.1} parent=0 // pred_check
    _
  $region7: #{transda_forward.1} parent=0 // pred_check_branch
    %19 = sbr.rel (0) target = $region9
  $region8: #{transda_forward.1} parent=0 // pred_region
    _
  $region9: #{transda_forward.1} parent=0 // pred_fallthru
    _
  // Predicated region
  $region10: #{transda_forward.1} parent=0 // pred_check
    _
  $region11: #{transda_forward.1} parent=0 // pred_check_branch
    %21 = sbr.rel (0) target = $region13
  $region12: #{transda_forward.1} parent=0 // pred_region
    _
  $region13: #{transda_forward.1} parent=0 // pred_fallthru
    _
  // Predicated region
  $region14: #{transda_forward.1} parent=0 // pred_check
    _
  $region15: #{transda_forward.1} parent=0 // pred_check_branch
    %23 = sbr.rel (0) target = $region17
  $region16: #{transda_forward.1} parent=0 // pred_region
    _
  $region17: #{transda_forward.1} parent=0 // pred_fallthru
    _
  // Predicated region
  $region18: #{transda_forward.1} parent=0 // pred_check
    _
  $region19: #{transda_forward.1} parent=0 // pred_check_branch
    %25 = sbr.rel (0) target = $region21
  $region20: #{transda_forward.1} parent=0 // pred_region
    _
  $region21: #{transda_forward.1} parent=0 // pred_fallthru
    _
  // Predicated region
  $region22: #{transda_forward.1} parent=0 // pred_check
    _
  $region23: #{transda_forward.1} parent=0 // pred_check_branch
    %27 = sbr.rel (0) target = $region25
  $region24: #{transda_forward.1} parent=0 // pred_region
    _
  $region25: #{transda_forward.1} parent=0 // pred_fallthru
    _
  // Predicated region
  $region26: #{transda_forward.1} parent=0 // pred_check
    _
  $region27: #{transda_forward.1} parent=0 // pred_check_branch
    %29 = sbr.rel (0) target = $region29
  $region28: #{transda_forward.1} parent=0 // pred_region
    _
  $region29: #{transda_forward.1} parent=0 // pred_fallthru
    _
  // Predicated region
  $region30: #{transda_forward.1} parent=0 // pred_check
    _
  $region31: #{transda_forward.1} parent=0 // pred_check_branch
    %31 = sbr.rel (0) target = $region33
  $region32: #{transda_forward.1} parent=0 // pred_region
    _
  $region33: #{transda_forward.1} parent=0 // pred_fallthru
    _
  // Predicated region
  $region34: #{transda_forward.1} parent=0 // pred_check
    _
  $region35: #{transda_forward.1} parent=0 // pred_check_branch
    %33 = sbr.rel (0) target = $region37
  $region36: #{transda_forward.1} parent=0 // pred_region
    _
  $region37: #{transda_forward.1} parent=0 // pred_fallthru
    _
  %v35 = vld [vmem:[%s0] sm:$0xff]
  %v36 = vld [vmem:[%s1] sm:$0xff]
  %v37 = vld [vmem:[%s1 + $0x8] sm:$0xff]
  %v38 = vld [vmem:[%s1 + $0x10] sm:$0xff]
  %v39 = vld [vmem:[%s1 + $0x18] sm:$0xff]
  %v40 = vld [vmem:[%s1 + $0x20] sm:$0xff]
  %v41 = vld [vmem:[%s1 + $0x28] sm:$0xff]
  %v42 = vld [vmem:[%s1 + $0x30] sm:$0xff]
  %v43 = vld [vmem:[%s1 + $0x38] sm:$0xff]
  %v44 = vld [vmem:[%s1 + $0x40] sm:$0xff]
  %v45 = vld [vmem:[%s1 + $0x48] sm:$0xff]
  %v46 = vld [vmem:[%s1 + $0x50] sm:$0xff]
  %v47 = vld [vmem:[%s1 + $0x58] sm:$0xff]
  %v48 = vld [vmem:[%s1 + $0x60] sm:$0xff]
  %v49 = vld [vmem:[%s1 + $0x68] sm:$0xff]
  %v50 = vld [vmem:[%s1 + $0x70] sm:$0xff]
  %v51 = vld [vmem:[%s1 + $0x78] sm:$0xff]
  %v52 = vld [vmem:[%s1 + $0x80] sm:$0xff]
  %v53 = vld [vmem:[%s1 + $0x88] sm:$0xff]
  %v54 = vld [vmem:[%s1 + $0x90] sm:$0xff]
  %v55 = vld [vmem:[%s1 + $0x98] sm:$0xff]
  %v56 = vld [vmem:[%s1 + $0xa0] sm:$0xff]
  %v57 = vld [vmem:[%s1 + $0xa8] sm:$0xff]
  %v58 = vld [vmem:[%s1 + $0xb0] sm:$0xff]
  %v59 = vld [vmem:[%s1 + $0xb8] sm:$0xff]
  %v60 = vld [vmem:[%s1 + $0xc0] sm:$0xff]
  %v61 = vld [vmem:[%s1 + $0xc8] sm:$0xff]
  %v62 = vld [vmem:[%s1 + $0xd0] sm:$0xff]
  %v63 = vld [vmem:[%s1 + $0xd8] sm:$0xff]
  %v64 = vld [vmem:[%s1 + $0xe0] sm:$0xff]
  %v65 = vld [vmem:[%s1 + $0xe8] sm:$0xff]
  %v66 = vld [vmem:[%s1 + $0xf0] sm:$0xff]
  %v67 = vld [vmem:[%s1 + $0xf8] sm:$0xff]
  %v68 = vld [vmem:[%s1 + $0x100] sm:$0xff]
  %v69 = vld [vmem:[%s1 + $0x108] sm:$0xff]
  %v70 = vld [vmem:[%s1 + $0x110] sm:$0xff]
  %v71 = vld [vmem:[%s1 + $0x118] sm:$0xff]
  %v72 = vld [vmem:[%s1 + $0x120] sm:$0xff]
  %v73 = vld [vmem:[%s1 + $0x128] sm:$0xff]
  %v74 = vld [vmem:[%s1 + $0x130] sm:$0xff]
  %v75 = vld [vmem:[%s1 + $0x138] sm:$0xff]
  %v76 = vld [vmem:[%s1 + $0x140] sm:$0xff]
  %v77 = vld [vmem:[%s1 + $0x148] sm:$0xff]
  %v78 = vld [vmem:[%s1 + $0x150] sm:$0xff]
  %v79 = vld [vmem:[%s1 + $0x158] sm:$0xff]
  %v80 = vld [vmem:[%s1 + $0x160] sm:$0xff]
  %v81 = vld [vmem:[%s1 + $0x168] sm:$0xff]
  %v82 = vld [vmem:[%s1 + $0x170] sm:$0xff]
  %v83 = vld [vmem:[%s1 + $0x178] sm:$0xff]
  %v84 = vld [vmem:[%s1 + $0x180] sm:$0xff]
  %v85 = vld [vmem:[%s1 + $0x188] sm:$0xff]
  %v86 = vld [vmem:[%s1 + $0x190] sm:$0xff]
  %v87 = vld [vmem:[%s1 + $0x198] sm:$0xff]
  %v88 = vld [vmem:[%s1 + $0x1a0] sm:$0xff]
  %v89 = vld [vmem:[%s1 + $0x1a8] sm:$0xff]
  %v90 = vld [vmem:[%s1 + $0x1b0] sm:$0xff]
  %v91 = vld [vmem:[%s1 + $0x1b8] sm:$0xff]
  %v92 = vld [vmem:[%s1 + $0x1c0] sm:$0xff]
  %v93 = vld [vmem:[%s1 + $0x1c8] sm:$0xff]
  %v94 = vld [vmem:[%s1 + $0x1d0] sm:$0xff]
  %v95 = vld [vmem:[%s1 + $0x1d8] sm:$0xff]
  %v96 = vld [vmem:[%s1 + $0x1e0] sm:$0xff]
  %v97 = vld [vmem:[%s1 + $0x1e8] sm:$0xff]
  %v98 = vld [vmem:[%s1 + $0x1f0] sm:$0xff]
  %v99 = vld [vmem:[%s1 + $0x1f8] sm:$0xff]
  %v100 = vld [vmem:[%s1 + $0x200] sm:$0xff]
  %v101 = vld [vmem:[%s1 + $0x208] sm:$0xff]
  %v102 = vld [vmem:[%s1 + $0x210] sm:$0xff]
  %v103 = vld [vmem:[%s1 + $0x218] sm:$0xff]
  %v104 = vld [vmem:[%s1 + $0x220] sm:$0xff]
  %v105 = vld [vmem:[%s1 + $0x228] sm:$0xff]
  %v106 = vld [vmem:[%s1 + $0x230] sm:$0xff]
  %v107 = vld [vmem:[%s1 + $0x238] sm:$0xff]
  %v108 = vld [vmem:[%s2] sm:$0x3f]
  %v110 = vperm.slane %v108, 0
  %v111 = vperm.slane %v108, 1
  %v112 = vperm.slane %v108, 2
  %v113 = vperm.slane %v108, 3
  %v114 = vperm.slane %v108, 4
  %v115 = vperm.slane %v108, 5
  %v123 = vunpack.c.l.b16 %v35
  %v124 = vunpack.c.h.b16 %v35
  %v125 = vpack.c.b16 %v123, %v123
  %v126 = vpack.c.b16 %v124, %v124
  %v200 = vunpack.c.l.b16 %v36
  %v201 = vunpack.c.h.b16 %v36
  %v202 = vunpack.c.l.b16 %v37
  %v203 = vunpack.c.h.b16 %v37
  %v204 = vunpack.c.l.b16 %v38
  %v205 = vunpack.c.h.b16 %v38
  %v206 = vunpack.c.l.b16 %v39
  %v207 = vunpack.c.h.b16 %v39
  %v208 = vunpack.c.l.b16 %v40
  %v209 = vunpack.c.h.b16 %v40
  %v210 = vunpack.c.l.b16 %v41
  %v211 = vunpack.c.h.b16 %v41
  %v212 = vunpack.c.l.b16 %v42
  %v213 = vunpack.c.h.b16 %v42
  %v214 = vunpack.c.l.b16 %v43
  %v215 = vunpack.c.h.b16 %v43
  %v216 = vunpack.c.l.b16 %v44
  %v217 = vunpack.c.h.b16 %v44
  %v218 = vunpack.c.l.b16 %v45
  %v219 = vunpack.c.h.b16 %v45
  %v220 = vunpack.c.l.b16 %v46
  %v221 = vunpack.c.h.b16 %v46
  %v222 = vunpack.c.l.b16 %v47
  %v223 = vunpack.c.h.b16 %v47
  %v224 = vunpack.c.l.b16 %v48
  %v225 = vunpack.c.h.b16 %v48
  %v226 = vunpack.c.l.b16 %v49
  %v227 = vunpack.c.h.b16 %v49
  %v228 = vunpack.c.l.b16 %v50
  %v229 = vunpack.c.h.b16 %v50
  %v230 = vunpack.c.l.b16 %v51
  %v231 = vunpack.c.h.b16 %v51
  %v232 = vunpack.c.l.b16 %v52
  %v233 = vunpack.c.h.b16 %v52
  %v234 = vunpack.c.l.b16 %v53
  %v235 = vunpack.c.h.b16 %v53
  %v236 = vunpack.c.l.b16 %v54
  %v237 = vunpack.c.h.b16 %v54
  %v238 = vunpack.c.l.b16 %v55
  %v239 = vunpack.c.h.b16 %v55
  %v240 = vunpack.c.l.b16 %v56
  %v241 = vunpack.c.h.b16 %v56
  %v242 = vunpack.c.l.b16 %v57
  %v243 = vunpack.c.h.b16 %v57
  %v244 = vunpack.c.l.b16 %v58
  %v245 = vunpack.c.h.b16 %v58
  %v246 = vunpack.c.l.b16 %v59
  %v247 = vunpack.c.h.b16 %v59
  %v248 = vunpack.c.l.b16 %v60
  %v249 = vunpack.c.h.b16 %v60
  %v250 = vunpack.c.l.b16 %v61
  %v251 = vunpack.c.h.b16 %v61
  %v252 = vunpack.c.l.b16 %v62
  %v253 = vunpack.c.h.b16 %v62
  %v254 = vunpack.c.l.b16 %v63
  %v255 = vunpack.c.h.b16 %v63
  %v256 = vunpack.c.l.b16 %v64
  %v257 = vunpack.c.h.b16 %v64
  %v258 = vunpack.c.l.b16 %v65
  %v259 = vunpack.c.h.b16 %v65
  %v260 = vunpack.c.l.b16 %v66
  %v261 = vunpack.c.h.b16 %v66
  %v262 = vunpack.c.l.b16 %v67
  %v263 = vunpack.c.h.b16 %v67
  %v264 = vunpack.c.l.b16 %v68
  %v265 = vunpack.c.h.b16 %v68
  %v266 = vunpack.c.l.b16 %v69
  %v267 = vunpack.c.h.b16 %v69
  %v268 = vunpack.c.l.b16 %v70
  %v269 = vunpack.c.h.b16 %v70
  %v270 = vunpack.c.l.b16 %v71
  %v271 = vunpack.c.h.b16 %v71
  %v272 = vunpack.c.l.b16 %v72
  %v273 = vunpack.c.h.b16 %v72
  %v274 = vunpack.c.l.b16 %v73
  %v275 = vunpack.c.h.b16 %v73
  %v276 = vunpack.c.l.b16 %v74
  %v277 = vunpack.c.h.b16 %v74
  %v278 = vunpack.c.l.b16 %v75
  %v279 = vunpack.c.h.b16 %v75
  %v280 = vunpack.c.l.b16 %v76
  %v281 = vunpack.c.h.b16 %v76
  %v282 = vunpack.c.l.b16 %v77
  %v283 = vunpack.c.h.b16 %v77
  %v284 = vunpack.c.l.b16 %v78
  %v285 = vunpack.c.h.b16 %v78
  %v286 = vunpack.c.l.b16 %v79
  %v287 = vunpack.c.h.b16 %v79
  %v288 = vunpack.c.l.b16 %v80
  %v289 = vunpack.c.h.b16 %v80
  %v290 = vunpack.c.l.b16 %v81
  %v291 = vunpack.c.h.b16 %v81
  %v292 = vunpack.c.l.b16 %v82
  %v293 = vunpack.c.h.b16 %v82
  %v294 = vunpack.c.l.b16 %v83
  %v295 = vunpack.c.h.b16 %v83
  %v296 = vunpack.c.l.b16 %v84
  %v297 = vunpack.c.h.b16 %v84
  %v298 = vunpack.c.l.b16 %v85
  %v299 = vunpack.c.h.b16 %v85
  %v300 = vunpack.c.l.b16 %v86
  %v301 = vunpack.c.h.b16 %v86
  %v302 = vunpack.c.l.b16 %v87
  %v303 = vunpack.c.h.b16 %v87
  %v304 = vunpack.c.l.b16 %v88
  %v305 = vunpack.c.h.b16 %v88
  %v306 = vunpack.c.l.b16 %v89
  %v307 = vunpack.c.h.b16 %v89
  %v308 = vunpack.c.l.b16 %v90
  %v309 = vunpack.c.h.b16 %v90
  %v310 = vunpack.c.l.b16 %v91
  %v311 = vunpack.c.h.b16 %v91
  %v312 = vunpack.c.l.b16 %v92
  %v313 = vunpack.c.h.b16 %v92
  %v314 = vunpack.c.l.b16 %v93
  %v315 = vunpack.c.h.b16 %v93
  %v316 = vunpack.c.l.b16 %v94
  %v317 = vunpack.c.h.b16 %v94
  %v318 = vunpack.c.l.b16 %v95
  %v319 = vunpack.c.h.b16 %v95
  %v320 = vunpack.c.l.b16 %v96
  %v321 = vunpack.c.h.b16 %v96
  %v322 = vunpack.c.l.b16 %v97
  %v323 = vunpack.c.h.b16 %v97
  %v324 = vunpack.c.l.b16 %v98
  %v325 = vunpack.c.h.b16 %v98
  %v326 = vunpack.c.l.b16 %v99
  %v327 = vunpack.c.h.b16 %v99
  %v328 = vunpack.c.l.b16 %v100
  %v329 = vunpack.c.h.b16 %v100
  %v330 = vunpack.c.l.b16 %v101
  %v331 = vunpack.c.h.b16 %v101
  %v332 = vunpack.c.l.b16 %v102
  %v333 = vunpack.c.h.b16 %v102
  %v334 = vunpack.c.l.b16 %v103
  %v335 = vunpack.c.h.b16 %v103
  %v336 = vunpack.c.l.b16 %v104
  %v337 = vunpack.c.h.b16 %v104
  %v338 = vunpack.c.l.b16 %v105
  %v339 = vunpack.c.h.b16 %v105
  %v340 = vunpack.c.l.b16 %v106
  %v341 = vunpack.c.h.b16 %v106
  %v342 = vunpack.c.l.b16 %v107
  %v343 = vunpack.c.h.b16 %v107
  %v344 = vpack.c.b16 %v206, %v200
  %v345 = vpack.c.b16 %v207, %v201
  %v346 = vpack.c.b16 %v208, %v202
  %v347 = vpack.c.b16 %v209, %v203
  %v348 = vpack.c.b16 %v210, %v204
  %v349 = vpack.c.b16 %v211, %v205
  %v350 = vpack.c.b16 %v218, %v212
  %v351 = vpack.c.b16 %v219, %v213
  %v352 = vpack.c.b16 %v220, %v214
  %v353 = vpack.c.b16 %v221, %v215
  %v354 = vpack.c.b16 %v222, %v216
  %v355 = vpack.c.b16 %v223, %v217
  %v356 = vpack.c.b16 %v230, %v224
  %v357 = vpack.c.b16 %v231, %v225
  %v358 = vpack.c.b16 %v232, %v226
  %v359 = vpack.c.b16 %v233, %v227
  %v360 = vpack.c.b16 %v234, %v228
  %v361 = vpack.c.b16 %v235, %v229
  %v362 = vpack.c.b16 %v242, %v236
  %v363 = vpack.c.b16 %v243, %v237
  %v364 = vpack.c.b16 %v244, %v238
  %v365 = vpack.c.b16 %v245, %v239
  %v366 = vpack.c.b16 %v246, %v240
  %v367 = vpack.c.b16 %v247, %v241
  %v368 = vpack.c.b16 %v254, %v248
  %v369 = vpack.c.b16 %v255, %v249
  %v370 = vpack.c.b16 %v256, %v250
  %v371 = vpack.c.b16 %v257, %v251
  %v372 = vpack.c.b16 %v258, %v252
  %v373 = vpack.c.b16 %v259, %v253
  %v374 = vpack.c.b16 %v266, %v260
  %v375 = vpack.c.b16 %v267, %v261
  %v376 = vpack.c.b16 %v268, %v262
  %v377 = vpack.c.b16 %v269, %v263
  %v378 = vpack.c.b16 %v270, %v264
  %v379 = vpack.c.b16 %v271, %v265
  %v380 = vpack.c.b16 %v278, %v272
  %v381 = vpack.c.b16 %v279, %v273
  %v382 = vpack.c.b16 %v280, %v274
  %v383 = vpack.c.b16 %v281, %v275
  %v384 = vpack.c.b16 %v282, %v276
  %v385 = vpack.c.b16 %v283, %v277
  %v386 = vpack.c.b16 %v290, %v284
  %v387 = vpack.c.b16 %v291, %v285
  %v388 = vpack.c.b16 %v292, %v286
  %v389 = vpack.c.b16 %v293, %v287
  %v390 = vpack.c.b16 %v294, %v288
  %v391 = vpack.c.b16 %v295, %v289
  %v392 = vpack.c.b16 %v302, %v296
  %v393 = vpack.c.b16 %v303, %v297
  %v394 = vpack.c.b16 %v304, %v298
  %v395 = vpack.c.b16 %v305, %v299
  %v396 = vpack.c.b16 %v306, %v300
  %v397 = vpack.c.b16 %v307, %v301
  %v398 = vpack.c.b16 %v314, %v308
  %v399 = vpack.c.b16 %v315, %v309
  %v400 = vpack.c.b16 %v316, %v310
  %v401 = vpack.c.b16 %v317, %v311
  %v402 = vpack.c.b16 %v318, %v312
  %v403 = vpack.c.b16 %v319, %v313
  %v404 = vpack.c.b16 %v326, %v320
  %v405 = vpack.c.b16 %v327, %v321
  %v406 = vpack.c.b16 %v328, %v322
  %v407 = vpack.c.b16 %v329, %v323
  %v408 = vpack.c.b16 %v330, %v324
  %v409 = vpack.c.b16 %v331, %v325
  %v410 = vpack.c.b16 %v338, %v332
  %v411 = vpack.c.b16 %v339, %v333
  %v412 = vpack.c.b16 %v340, %v334
  %v413 = vpack.c.b16 %v341, %v335
  %v414 = vpack.c.b16 %v342, %v336
  %v415 = vpack.c.b16 %v343, %v337
  %vm488 = vcmask 523264
  %v490 = vsel %vm488, %v126, 0
  %492 = vmatpush.bf16.msra.mxu0 %v386
  %493 = vmatpush.bf16.msra.mxu0 %v380
  %494 = vmatpush.bf16.msra.mxu0 %v374
  %495 = vmatpush.bf16.msra.mxu0 %v368
  %496 = vmatpush.bf16.msra.mxu0 %v362
  %497 = vmatpush.bf16.msra.mxu0 %v356
  %498 = vmatpush.bf16.msra.mxu0 %v350
  %499 = vmatpush.bf16.msra.mxu0 %v344
  %500 = vmatmul.bf16.gmra.mxu0 %v125
  %v501 = vpop.f32.mrf.mxu0
  %v502 = vadd.f32 %v110, %v501
  %v503 = vpop.f32.mrf.mxu0
  %504 = vdwg.mxu0
  %505 = vmatpush.bf16.msra.mxu0 0
  %506 = vmatpush.bf16.msra.mxu0 0
  %507 = vmatpush.bf16.msra.mxu0 0
  %508 = vmatpush.bf16.msra.mxu0 0
  %509 = vmatpush.bf16.msra.mxu0 %v410
  %510 = vmatpush.bf16.msra.mxu0 %v404
  %511 = vmatpush.bf16.msra.mxu0 %v398
  %512 = vmatpush.bf16.msra.mxu0 %v392
  %513 = vmatmul.bf16.gmra.mxu0 %v490
  %v514 = vpop.f32.mrf.mxu0
  %v515 = vadd.f32 %v502, %v514
  %v516 = vpop.f32.mrf.mxu0
  %517 = vdwg.mxu0
  %518 = vmatpush.bf16.msra.mxu0 %v387
  %519 = vmatpush.bf16.msra.mxu0 %v381
  %520 = vmatpush.bf16.msra.mxu0 %v375
  %521 = vmatpush.bf16.msra.mxu0 %v369
  %522 = vmatpush.bf16.msra.mxu0 %v363
  %523 = vmatpush.bf16.msra.mxu0 %v357
  %524 = vmatpush.bf16.msra.mxu0 %v351
  %525 = vmatpush.bf16.msra.mxu0 %v345
  %526 = vmatmul.bf16.gmra.mxu0 %v125
  %v527 = vpop.f32.mrf.mxu0
  %v528 = vadd.f32 %v111, %v527
  %v529 = vpop.f32.mrf.mxu0
  %530 = vdwg.mxu0
  %531 = vmatpush.bf16.msra.mxu0 0
  %532 = vmatpush.bf16.msra.mxu0 0
  %533 = vmatpush.bf16.msra.mxu0 0
  %534 = vmatpush.bf16.msra.mxu0 0
  %535 = vmatpush.bf16.msra.mxu0 %v411
  %536 = vmatpush.bf16.msra.mxu0 %v405
  %537 = vmatpush.bf16.msra.mxu0 %v399
  %538 = vmatpush.bf16.msra.mxu0 %v393
  %539 = vmatmul.bf16.gmra.mxu0 %v490
  %v540 = vpop.f32.mrf.mxu0
  %v541 = vadd.f32 %v528, %v540
  %v542 = vpop.f32.mrf.mxu0
  %543 = vdwg.mxu0
  %544 = vmatpush.bf16.msra.mxu0 %v388
  %545 = vmatpush.bf16.msra.mxu0 %v382
  %546 = vmatpush.bf16.msra.mxu0 %v376
  %547 = vmatpush.bf16.msra.mxu0 %v370
  %548 = vmatpush.bf16.msra.mxu0 %v364
  %549 = vmatpush.bf16.msra.mxu0 %v358
  %550 = vmatpush.bf16.msra.mxu0 %v352
  %551 = vmatpush.bf16.msra.mxu0 %v346
  %552 = vmatmul.bf16.gmra.mxu0 %v125
  %v553 = vpop.f32.mrf.mxu0
  %v554 = vadd.f32 %v112, %v553
  %v555 = vpop.f32.mrf.mxu0
  %556 = vdwg.mxu0
  %557 = vmatpush.bf16.msra.mxu0 0
  %558 = vmatpush.bf16.msra.mxu0 0
  %559 = vmatpush.bf16.msra.mxu0 0
  %560 = vmatpush.bf16.msra.mxu0 0
  %561 = vmatpush.bf16.msra.mxu0 %v412
  %562 = vmatpush.bf16.msra.mxu0 %v406
  %563 = vmatpush.bf16.msra.mxu0 %v400
  %564 = vmatpush.bf16.msra.mxu0 %v394
  %565 = vmatmul.bf16.gmra.mxu0 %v490
  %v566 = vpop.f32.mrf.mxu0
  %v567 = vadd.f32 %v554, %v566
  %v568 = vpop.f32.mrf.mxu0
  %569 = vdwg.mxu0
  %570 = vmatpush.bf16.msra.mxu0 %v389
  %571 = vmatpush.bf16.msra.mxu0 %v383
  %572 = vmatpush.bf16.msra.mxu0 %v377
  %573 = vmatpush.bf16.msra.mxu0 %v371
  %574 = vmatpush.bf16.msra.mxu0 %v365
  %575 = vmatpush.bf16.msra.mxu0 %v359
  %576 = vmatpush.bf16.msra.mxu0 %v353
  %577 = vmatpush.bf16.msra.mxu0 %v347
  %578 = vmatmul.bf16.gmra.mxu0 %v125
  %v579 = vpop.f32.mrf.mxu0
  %v580 = vadd.f32 %v113, %v579
  %v581 = vpop.f32.mrf.mxu0
  %582 = vdwg.mxu0
  %583 = vmatpush.bf16.msra.mxu0 0
  %584 = vmatpush.bf16.msra.mxu0 0
  %585 = vmatpush.bf16.msra.mxu0 0
  %586 = vmatpush.bf16.msra.mxu0 0
  %587 = vmatpush.bf16.msra.mxu0 %v413
  %588 = vmatpush.bf16.msra.mxu0 %v407
  %589 = vmatpush.bf16.msra.mxu0 %v401
  %590 = vmatpush.bf16.msra.mxu0 %v395
  %591 = vmatmul.bf16.gmra.mxu0 %v490
  %v592 = vpop.f32.mrf.mxu0
  %v593 = vadd.f32 %v580, %v592
  %v594 = vpop.f32.mrf.mxu0
  %595 = vdwg.mxu0
  %596 = vmatpush.bf16.msra.mxu0 %v390
  %597 = vmatpush.bf16.msra.mxu0 %v384
  %598 = vmatpush.bf16.msra.mxu0 %v378
  %599 = vmatpush.bf16.msra.mxu0 %v372
  %600 = vmatpush.bf16.msra.mxu0 %v366
  %601 = vmatpush.bf16.msra.mxu0 %v360
  %602 = vmatpush.bf16.msra.mxu0 %v354
  %603 = vmatpush.bf16.msra.mxu0 %v348
  %604 = vmatmul.bf16.gmra.mxu0 %v125
  %v605 = vpop.f32.mrf.mxu0
  %v606 = vadd.f32 %v114, %v605
  %v607 = vpop.f32.mrf.mxu0
  %608 = vdwg.mxu0
  %609 = vmatpush.bf16.msra.mxu0 0
  %610 = vmatpush.bf16.msra.mxu0 0
  %611 = vmatpush.bf16.msra.mxu0 0
  %612 = vmatpush.bf16.msra.mxu0 0
  %613 = vmatpush.bf16.msra.mxu0 %v414
  %614 = vmatpush.bf16.msra.mxu0 %v408
  %615 = vmatpush.bf16.msra.mxu0 %v402
  %616 = vmatpush.bf16.msra.mxu0 %v396
  %617 = vmatmul.bf16.gmra.mxu0 %v490
  %v618 = vpop.f32.mrf.mxu0
  %v619 = vadd.f32 %v606, %v618
  %v620 = vpop.f32.mrf.mxu0
  %621 = vdwg.mxu0
  %622 = vmatpush.bf16.msra.mxu0 %v391
  %623 = vmatpush.bf16.msra.mxu0 %v385
  %624 = vmatpush.bf16.msra.mxu0 %v379
  %625 = vmatpush.bf16.msra.mxu0 %v373
  %626 = vmatpush.bf16.msra.mxu0 %v367
  %627 = vmatpush.bf16.msra.mxu0 %v361
  %628 = vmatpush.bf16.msra.mxu0 %v355
  %629 = vmatpush.bf16.msra.mxu0 %v349
  %630 = vmatmul.bf16.gmra.mxu0 %v125
  %v631 = vpop.f32.mrf.mxu0
  %v632 = vadd.f32 %v115, %v631
  %v633 = vpop.f32.mrf.mxu0
  %634 = vdwg.mxu0
  %635 = vmatpush.bf16.msra.mxu0 0
  %636 = vmatpush.bf16.msra.mxu0 0
  %637 = vmatpush.bf16.msra.mxu0 0
  %638 = vmatpush.bf16.msra.mxu0 0
  %639 = vmatpush.bf16.msra.mxu0 %v415
  %640 = vmatpush.bf16.msra.mxu0 %v409
  %641 = vmatpush.bf16.msra.mxu0 %v403
  %642 = vmatpush.bf16.msra.mxu0 %v397
  %643 = vmatmul.bf16.gmra.mxu0 %v490
  %v644 = vpop.f32.mrf.mxu0
  %v645 = vadd.f32 %v632, %v644
  %v646 = vpop.f32.mrf.mxu0
  %647 = vdwg.mxu0
  %v648 = vpack.c.bf16 %v515, %v515
  %v649 = vpack.c.bf16 %v541, %v541
  %v650 = vpack.c.bf16 %v567, %v567
  %v651 = vpack.c.bf16 %v593, %v593
  %v652 = vpack.c.bf16 %v619, %v619
  %v653 = vpack.c.bf16 %v645, %v645
  %v654 = vld [vmem:[%s3] sm:$0xff]
  %v655 = vld [vmem:[%s3 + $0x8] sm:$0xff]
  %v656 = vld [vmem:[%s3 + $0x10] sm:$0xff]
  %v657 = vld [vmem:[%s3 + $0x18] sm:$0xff]
  %v658 = vld [vmem:[%s3 + $0x20] sm:$0xff]
  %v659 = vld [vmem:[%s3 + $0x28] sm:$0xff]
  %v660 = vld [vmem:[%s3 + $0x30] sm:$0xff]
  %v661 = vld [vmem:[%s3 + $0x38] sm:$0xff]
  %v662 = vld [vmem:[%s3 + $0x40] sm:$0xff]
  %v663 = vld [vmem:[%s3 + $0x48] sm:$0xff]
  %v664 = vld [vmem:[%s3 + $0x50] sm:$0xff]
  %v665 = vld [vmem:[%s3 + $0x58] sm:$0xff]
  %v666 = vld [vmem:[%s3 + $0x60] sm:$0xff]
  %v667 = vld [vmem:[%s3 + $0x68] sm:$0xff]
  %v668 = vld [vmem:[%s3 + $0x70] sm:$0xff]
  %v669 = vld [vmem:[%s3 + $0x78] sm:$0xff]
  %v670 = vld [vmem:[%s3 + $0x80] sm:$0xff]
  %v671 = vld [vmem:[%s3 + $0x88] sm:$0xff]
  %v672 = vld [vmem:[%s3 + $0x90] sm:$0xff]
  %v673 = vld [vmem:[%s3 + $0x98] sm:$0xff]
  %v674 = vld [vmem:[%s3 + $0xa0] sm:$0xff]
  %v675 = vld [vmem:[%s3 + $0xa8] sm:$0xff]
  %v676 = vld [vmem:[%s3 + $0xb0] sm:$0xff]
  %v677 = vld [vmem:[%s3 + $0xb8] sm:$0xff]
  %v678 = vld [vmem:[%s3 + $0xc0] sm:$0xff]
  %v679 = vld [vmem:[%s3 + $0xc8] sm:$0xff]
  %v680 = vld [vmem:[%s3 + $0xd0] sm:$0xff]
  %v681 = vld [vmem:[%s3 + $0xd8] sm:$0xff]
  %v682 = vld [vmem:[%s3 + $0xe0] sm:$0xff]
  %v683 = vld [vmem:[%s3 + $0xe8] sm:$0xff]
  %v684 = vld [vmem:[%s3 + $0xf0] sm:$0xff]
  %v685 = vld [vmem:[%s3 + $0xf8] sm:$0xff]
  %v686 = vld [vmem:[%s3 + $0x100] sm:$0xff]
  %v687 = vld [vmem:[%s3 + $0x108] sm:$0xff]
  %v688 = vld [vmem:[%s3 + $0x110] sm:$0xff]
  %v689 = vld [vmem:[%s3 + $0x118] sm:$0xff]
  %v690 = vld [vmem:[%s3 + $0x120] sm:$0xff]
  %v691 = vld [vmem:[%s3 + $0x128] sm:$0xff]
  %v692 = vld [vmem:[%s3 + $0x130] sm:$0xff]
  %v693 = vld [vmem:[%s3 + $0x138] sm:$0xff]
  %v694 = vld [vmem:[%s3 + $0x140] sm:$0xff]
  %v695 = vld [vmem:[%s3 + $0x148] sm:$0xff]
  %v696 = vld [vmem:[%s3 + $0x150] sm:$0xff]
  %v697 = vld [vmem:[%s3 + $0x158] sm:$0xff]
  %v698 = vld [vmem:[%s3 + $0x160] sm:$0xff]
  %v699 = vld [vmem:[%s3 + $0x168] sm:$0xff]
  %v700 = vld [vmem:[%s3 + $0x170] sm:$0xff]
  %v701 = vld [vmem:[%s3 + $0x178] sm:$0xff]
  %v702 = vld [vmem:[%s3 + $0x180] sm:$0xff]
  %v703 = vld [vmem:[%s3 + $0x188] sm:$0xff]
  %v704 = vld [vmem:[%s3 + $0x190] sm:$0xff]
  %v705 = vld [vmem:[%s3 + $0x198] sm:$0xff]
  %v706 = vld [vmem:[%s3 + $0x1a0] sm:$0xff]
  %v707 = vld [vmem:[%s3 + $0x1a8] sm:$0xff]
  %v708 = vld [vmem:[%s3 + $0x1b0] sm:$0xff]
  %v709 = vld [vmem:[%s3 + $0x1b8] sm:$0xff]
  %v710 = vld [vmem:[%s3 + $0x1c0] sm:$0xff]
  %v711 = vld [vmem:[%s3 + $0x1c8] sm:$0xff]
  %v712 = vld [vmem:[%s3 + $0x1d0] sm:$0xff]
  %v713 = vld [vmem:[%s3 + $0x1d8] sm:$0xff]
  %v714 = vld [vmem:[%s3 + $0x1e0] sm:$0xff]
  %v715 = vld [vmem:[%s3 + $0x1e8] sm:$0xff]
  %v716 = vld [vmem:[%s3 + $0x1f0] sm:$0xff]
  %v717 = vld [vmem:[%s3 + $0x1f8] sm:$0xff]
  %v718 = vld [vmem:[%s3 + $0x200] sm:$0xff]
  %v719 = vld [vmem:[%s3 + $0x208] sm:$0xff]
  %v720 = vld [vmem:[%s3 + $0x210] sm:$0xff]
  %v721 = vld [vmem:[%s3 + $0x218] sm:$0xff]
  %v722 = vld [vmem:[%s3 + $0x220] sm:$0xff]
  %v723 = vld [vmem:[%s3 + $0x228] sm:$0xff]
  %v724 = vld [vmem:[%s3 + $0x230] sm:$0xff]
  %v725 = vld [vmem:[%s3 + $0x238] sm:$0xff]
  %v726 = vld [vmem:[%s3 + $0x240] sm:$0xff]
  %v727 = vld [vmem:[%s3 + $0x248] sm:$0xff]
  %v728 = vld [vmem:[%s3 + $0x250] sm:$0xff]
  %v729 = vld [vmem:[%s3 + $0x258] sm:$0xff]
  %v730 = vld [vmem:[%s3 + $0x260] sm:$0xff]
  %v731 = vld [vmem:[%s3 + $0x268] sm:$0xff]
  %v732 = vld [vmem:[%s3 + $0x270] sm:$0xff]
  %v733 = vld [vmem:[%s3 + $0x278] sm:$0xff]
  %v734 = vld [vmem:[%s3 + $0x280] sm:$0xff]
  %v735 = vld [vmem:[%s3 + $0x288] sm:$0xff]
  %v736 = vld [vmem:[%s3 + $0x290] sm:$0xff]
  %v737 = vld [vmem:[%s3 + $0x298] sm:$0xff]
  %v738 = vld [vmem:[%s3 + $0x2a0] sm:$0xff]
  %v739 = vld [vmem:[%s3 + $0x2a8] sm:$0xff]
  %v740 = vld [vmem:[%s3 + $0x2b0] sm:$0xff]
  %v741 = vld [vmem:[%s3 + $0x2b8] sm:$0xff]
  %v742 = vld [vmem:[%s3 + $0x2c0] sm:$0xff]
  %v743 = vld [vmem:[%s3 + $0x2c8] sm:$0xff]
  %v744 = vld [vmem:[%s3 + $0x2d0] sm:$0xff]
  %v745 = vld [vmem:[%s3 + $0x2d8] sm:$0xff]
  %v746 = vld [vmem:[%s3 + $0x2e0] sm:$0xff]
  %v747 = vld [vmem:[%s3 + $0x2e8] sm:$0xff]
  %v748 = vld [vmem:[%s3 + $0x2f0] sm:$0xff]
  %v749 = vld [vmem:[%s3 + $0x2f8] sm:$0xff]
  %v750 = vld [vmem:[%s4] sm:$0x3]
  %v752 = vperm.slane %v750, 0
  %v753 = vperm.slane %v750, 1
  %v852 = vunpack.c.l.b16 %v654
  %v853 = vunpack.c.h.b16 %v654
  %v854 = vunpack.c.l.b16 %v655
  %v855 = vunpack.c.h.b16 %v655
  %v856 = vunpack.c.l.b16 %v656
  %v857 = vunpack.c.h.b16 %v656
  %v858 = vunpack.c.l.b16 %v657
  %v859 = vunpack.c.h.b16 %v657
  %v860 = vunpack.c.l.b16 %v658
  %v861 = vunpack.c.h.b16 %v658
  %v862 = vunpack.c.l.b16 %v659
  %v863 = vunpack.c.h.b16 %v659
  %v864 = vunpack.c.l.b16 %v660
  %v865 = vunpack.c.h.b16 %v660
  %v866 = vunpack.c.l.b16 %v661
  %v867 = vunpack.c.h.b16 %v661
  %v868 = vunpack.c.l.b16 %v662
  %v869 = vunpack.c.h.b16 %v662
  %v870 = vunpack.c.l.b16 %v663
  %v871 = vunpack.c.h.b16 %v663
  %v872 = vunpack.c.l.b16 %v664
  %v873 = vunpack.c.h.b16 %v664
  %v874 = vunpack.c.l.b16 %v665
  %v875 = vunpack.c.h.b16 %v665
  %v876 = vunpack.c.l.b16 %v666
  %v877 = vunpack.c.h.b16 %v666
  %v878 = vunpack.c.l.b16 %v667
  %v879 = vunpack.c.h.b16 %v667
  %v880 = vunpack.c.l.b16 %v668
  %v881 = vunpack.c.h.b16 %v668
  %v882 = vunpack.c.l.b16 %v669
  %v883 = vunpack.c.h.b16 %v669
  %v884 = vunpack.c.l.b16 %v670
  %v885 = vunpack.c.h.b16 %v670
  %v886 = vunpack.c.l.b16 %v671
  %v887 = vunpack.c.h.b16 %v671
  %v888 = vunpack.c.l.b16 %v672
  %v889 = vunpack.c.h.b16 %v672
  %v890 = vunpack.c.l.b16 %v673
  %v891 = vunpack.c.h.b16 %v673
  %v892 = vunpack.c.l.b16 %v674
  %v893 = vunpack.c.h.b16 %v674
  %v894 = vunpack.c.l.b16 %v675
  %v895 = vunpack.c.h.b16 %v675
  %v896 = vunpack.c.l.b16 %v676
  %v897 = vunpack.c.h.b16 %v676
  %v898 = vunpack.c.l.b16 %v677
  %v899 = vunpack.c.h.b16 %v677
  %v900 = vunpack.c.l.b16 %v678
  %v901 = vunpack.c.h.b16 %v678
  %v902 = vunpack.c.l.b16 %v679
  %v903 = vunpack.c.h.b16 %v679
  %v904 = vunpack.c.l.b16 %v680
  %v905 = vunpack.c.h.b16 %v680
  %v906 = vunpack.c.l.b16 %v681
  %v907 = vunpack.c.h.b16 %v681
  %v908 = vunpack.c.l.b16 %v682
  %v909 = vunpack.c.h.b16 %v682
  %v910 = vunpack.c.l.b16 %v683
  %v911 = vunpack.c.h.b16 %v683
  %v912 = vunpack.c.l.b16 %v684
  %v913 = vunpack.c.h.b16 %v684
  %v914 = vunpack.c.l.b16 %v685
  %v915 = vunpack.c.h.b16 %v685
  %v916 = vunpack.c.l.b16 %v686
  %v917 = vunpack.c.h.b16 %v686
  %v918 = vunpack.c.l.b16 %v687
  %v919 = vunpack.c.h.b16 %v687
  %v920 = vunpack.c.l.b16 %v688
  %v921 = vunpack.c.h.b16 %v688
  %v922 = vunpack.c.l.b16 %v689
  %v923 = vunpack.c.h.b16 %v689
  %v924 = vunpack.c.l.b16 %v690
  %v925 = vunpack.c.h.b16 %v690
  %v926 = vunpack.c.l.b16 %v691
  %v927 = vunpack.c.h.b16 %v691
  %v928 = vunpack.c.l.b16 %v692
  %v929 = vunpack.c.h.b16 %v692
  %v930 = vunpack.c.l.b16 %v693
  %v931 = vunpack.c.h.b16 %v693
  %v932 = vunpack.c.l.b16 %v694
  %v933 = vunpack.c.h.b16 %v694
  %v934 = vunpack.c.l.b16 %v695
  %v935 = vunpack.c.h.b16 %v695
  %v936 = vunpack.c.l.b16 %v696
  %v937 = vunpack.c.h.b16 %v696
  %v938 = vunpack.c.l.b16 %v697
  %v939 = vunpack.c.h.b16 %v697
  %v940 = vunpack.c.l.b16 %v698
  %v941 = vunpack.c.h.b16 %v698
  %v942 = vunpack.c.l.b16 %v699
  %v943 = vunpack.c.h.b16 %v699
  %v944 = vunpack.c.l.b16 %v700
  %v945 = vunpack.c.h.b16 %v700
  %v946 = vunpack.c.l.b16 %v701
  %v947 = vunpack.c.h.b16 %v701
  %v948 = vunpack.c.l.b16 %v702
  %v949 = vunpack.c.h.b16 %v702
  %v950 = vunpack.c.l.b16 %v703
  %v951 = vunpack.c.h.b16 %v703
  %v952 = vunpack.c.l.b16 %v704
  %v953 = vunpack.c.h.b16 %v704
  %v954 = vunpack.c.l.b16 %v705
  %v955 = vunpack.c.h.b16 %v705
  %v956 = vunpack.c.l.b16 %v706
  %v957 = vunpack.c.h.b16 %v706
  %v958 = vunpack.c.l.b16 %v707
  %v959 = vunpack.c.h.b16 %v707
  %v960 = vunpack.c.l.b16 %v708
  %v961 = vunpack.c.h.b16 %v708
  %v962 = vunpack.c.l.b16 %v709
  %v963 = vunpack.c.h.b16 %v709
  %v964 = vunpack.c.l.b16 %v710
  %v965 = vunpack.c.h.b16 %v710
  %v966 = vunpack.c.l.b16 %v711
  %v967 = vunpack.c.h.b16 %v711
  %v968 = vunpack.c.l.b16 %v712
  %v969 = vunpack.c.h.b16 %v712
  %v970 = vunpack.c.l.b16 %v713
  %v971 = vunpack.c.h.b16 %v713
  %v972 = vunpack.c.l.b16 %v714
  %v973 = vunpack.c.h.b16 %v714
  %v974 = vunpack.c.l.b16 %v715
  %v975 = vunpack.c.h.b16 %v715
  %v976 = vunpack.c.l.b16 %v716
  %v977 = vunpack.c.h.b16 %v716
  %v978 = vunpack.c.l.b16 %v717
  %v979 = vunpack.c.h.b16 %v717
  %v980 = vunpack.c.l.b16 %v718
  %v981 = vunpack.c.h.b16 %v718
  %v982 = vunpack.c.l.b16 %v719
  %v983 = vunpack.c.h.b16 %v719
  %v984 = vunpack.c.l.b16 %v720
  %v985 = vunpack.c.h.b16 %v720
  %v986 = vunpack.c.l.b16 %v721
  %v987 = vunpack.c.h.b16 %v721
  %v988 = vunpack.c.l.b16 %v722
  %v989 = vunpack.c.h.b16 %v722
  %v990 = vunpack.c.l.b16 %v723
  %v991 = vunpack.c.h.b16 %v723
  %v992 = vunpack.c.l.b16 %v724
  %v993 = vunpack.c.h.b16 %v724
  %v994 = vunpack.c.l.b16 %v725
  %v995 = vunpack.c.h.b16 %v725
  %v996 = vunpack.c.l.b16 %v726
  %v997 = vunpack.c.h.b16 %v726
  %v998 = vunpack.c.l.b16 %v727
  %v999 = vunpack.c.h.b16 %v727
  %v1000 = vunpack.c.l.b16 %v728
  %v1001 = vunpack.c.h.b16 %v728
  %v1002 = vunpack.c.l.b16 %v729
  %v1003 = vunpack.c.h.b16 %v729
  %v1004 = vunpack.c.l.b16 %v730
  %v1005 = vunpack.c.h.b16 %v730
  %v1006 = vunpack.c.l.b16 %v731
  %v1007 = vunpack.c.h.b16 %v731
  %v1008 = vunpack.c.l.b16 %v732
  %v1009 = vunpack.c.h.b16 %v732
  %v1010 = vunpack.c.l.b16 %v733
  %v1011 = vunpack.c.h.b16 %v733
  %v1012 = vunpack.c.l.b16 %v734
  %v1013 = vunpack.c.h.b16 %v734
  %v1014 = vunpack.c.l.b16 %v735
  %v1015 = vunpack.c.h.b16 %v735
  %v1016 = vunpack.c.l.b16 %v736
  %v1017 = vunpack.c.h.b16 %v736
  %v1018 = vunpack.c.l.b16 %v737
  %v1019 = vunpack.c.h.b16 %v737
  %v1020 = vunpack.c.l.b16 %v738
  %v1021 = vunpack.c.h.b16 %v738
  %v1022 = vunpack.c.l.b16 %v739
  %v1023 = vunpack.c.h.b16 %v739
  %v1024 = vunpack.c.l.b16 %v740
  %v1025 = vunpack.c.h.b16 %v740
  %v1026 = vunpack.c.l.b16 %v741
  %v1027 = vunpack.c.h.b16 %v741
  %v1028 = vunpack.c.l.b16 %v742
  %v1029 = vunpack.c.h.b16 %v742
  %v1030 = vunpack.c.l.b16 %v743
  %v1031 = vunpack.c.h.b16 %v743
  %v1032 = vunpack.c.l.b16 %v744
  %v1033 = vunpack.c.h.b16 %v744
  %v1034 = vunpack.c.l.b16 %v745
  %v1035 = vunpack.c.h.b16 %v745
  %v1036 = vunpack.c.l.b16 %v746
  %v1037 = vunpack.c.h.b16 %v746
  %v1038 = vunpack.c.l.b16 %v747
  %v1039 = vunpack.c.h.b16 %v747
  %v1040 = vunpack.c.l.b16 %v748
  %v1041 = vunpack.c.h.b16 %v748
  %v1042 = vunpack.c.l.b16 %v749
  %v1043 = vunpack.c.h.b16 %v749
  %v1044 = vpack.c.b16 %v854, %v852
  %v1045 = vpack.c.b16 %v855, %v853
  %v1046 = vpack.c.b16 %v858, %v856
  %v1047 = vpack.c.b16 %v859, %v857
  %v1048 = vpack.c.b16 %v862, %v860
  %v1049 = vpack.c.b16 %v863, %v861
  %v1050 = vpack.c.b16 %v866, %v864
  %v1051 = vpack.c.b16 %v867, %v865
  %v1052 = vpack.c.b16 %v870, %v868
  %v1053 = vpack.c.b16 %v871, %v869
  %v1054 = vpack.c.b16 %v874, %v872
  %v1055 = vpack.c.b16 %v875, %v873
  %v1056 = vpack.c.b16 %v878, %v876
  %v1057 = vpack.c.b16 %v879, %v877
  %v1058 = vpack.c.b16 %v882, %v880
  %v1059 = vpack.c.b16 %v883, %v881
  %v1060 = vpack.c.b16 %v886, %v884
  %v1061 = vpack.c.b16 %v887, %v885
  %v1062 = vpack.c.b16 %v890, %v888
  %v1063 = vpack.c.b16 %v891, %v889
  %v1064 = vpack.c.b16 %v894, %v892
  %v1065 = vpack.c.b16 %v895, %v893
  %v1066 = vpack.c.b16 %v898, %v896
  %v1067 = vpack.c.b16 %v899, %v897
  %v1068 = vpack.c.b16 %v902, %v900
  %v1069 = vpack.c.b16 %v903, %v901
  %v1070 = vpack.c.b16 %v906, %v904
  %v1071 = vpack.c.b16 %v907, %v905
  %v1072 = vpack.c.b16 %v910, %v908
  %v1073 = vpack.c.b16 %v911, %v909
  %v1074 = vpack.c.b16 %v914, %v912
  %v1075 = vpack.c.b16 %v915, %v913
  %v1076 = vpack.c.b16 %v918, %v916
  %v1077 = vpack.c.b16 %v919, %v917
  %v1078 = vpack.c.b16 %v922, %v920
  %v1079 = vpack.c.b16 %v923, %v921
  %v1080 = vpack.c.b16 %v926, %v924
  %v1081 = vpack.c.b16 %v927, %v925
  %v1082 = vpack.c.b16 %v930, %v928
  %v1083 = vpack.c.b16 %v931, %v929
  %v1084 = vpack.c.b16 %v934, %v932
  %v1085 = vpack.c.b16 %v935, %v933
  %v1086 = vpack.c.b16 %v938, %v936
  %v1087 = vpack.c.b16 %v939, %v937
  %v1088 = vpack.c.b16 %v942, %v940
  %v1089 = vpack.c.b16 %v943, %v941
  %v1090 = vpack.c.b16 %v946, %v944
  %v1091 = vpack.c.b16 %v947, %v945
  %v1092 = vpack.c.b16 %v950, %v948
  %v1093 = vpack.c.b16 %v951, %v949
  %v1094 = vpack.c.b16 %v954, %v952
  %v1095 = vpack.c.b16 %v955, %v953
  %v1096 = vpack.c.b16 %v958, %v956
  %v1097 = vpack.c.b16 %v959, %v957
  %v1098 = vpack.c.b16 %v962, %v960
  %v1099 = vpack.c.b16 %v963, %v961
  %v1100 = vpack.c.b16 %v966, %v964
  %v1101 = vpack.c.b16 %v967, %v965
  %v1102 = vpack.c.b16 %v970, %v968
  %v1103 = vpack.c.b16 %v971, %v969
  %v1104 = vpack.c.b16 %v974, %v972
  %v1105 = vpack.c.b16 %v975, %v973
  %v1106 = vpack.c.b16 %v978, %v976
  %v1107 = vpack.c.b16 %v979, %v977
  %v1108 = vpack.c.b16 %v982, %v980
  %v1109 = vpack.c.b16 %v983, %v981
  %v1110 = vpack.c.b16 %v986, %v984
  %v1111 = vpack.c.b16 %v987, %v985
  %v1112 = vpack.c.b16 %v990, %v988
  %v1113 = vpack.c.b16 %v991, %v989
  %v1114 = vpack.c.b16 %v994, %v992
  %v1115 = vpack.c.b16 %v995, %v993
  %v1116 = vpack.c.b16 %v998, %v996
  %v1117 = vpack.c.b16 %v999, %v997
  %v1118 = vpack.c.b16 %v1002, %v1000
  %v1119 = vpack.c.b16 %v1003, %v1001
  %v1120 = vpack.c.b16 %v1006, %v1004
  %v1121 = vpack.c.b16 %v1007, %v1005
  %v1122 = vpack.c.b16 %v1010, %v1008
  %v1123 = vpack.c.b16 %v1011, %v1009
  %v1124 = vpack.c.b16 %v1014, %v1012
  %v1125 = vpack.c.b16 %v1015, %v1013
  %v1126 = vpack.c.b16 %v1018, %v1016
  %v1127 = vpack.c.b16 %v1019, %v1017
  %v1128 = vpack.c.b16 %v1022, %v1020
  %v1129 = vpack.c.b16 %v1023, %v1021
  %v1130 = vpack.c.b16 %v1026, %v1024
  %v1131 = vpack.c.b16 %v1027, %v1025
  %v1132 = vpack.c.b16 %v1030, %v1028
  %v1133 = vpack.c.b16 %v1031, %v1029
  %v1134 = vpack.c.b16 %v1034, %v1032
  %v1135 = vpack.c.b16 %v1035, %v1033
  %v1136 = vpack.c.b16 %v1038, %v1036
  %v1137 = vpack.c.b16 %v1039, %v1037
  %v1138 = vpack.c.b16 %v1042, %v1040
  %v1139 = vpack.c.b16 %v1043, %v1041
  %1236 = vmatpush.bf16.msra.mxu0 %v1058
  %1237 = vmatpush.bf16.msra.mxu0 %v1056
  %1238 = vmatpush.bf16.msra.mxu0 %v1054
  %1239 = vmatpush.bf16.msra.mxu0 %v1052
  %1240 = vmatpush.bf16.msra.mxu0 %v1050
  %1241 = vmatpush.bf16.msra.mxu0 %v1048
  %1242 = vmatpush.bf16.msra.mxu0 %v1046
  %1243 = vmatpush.bf16.msra.mxu0 %v1044
  %1244 = vmatmul.bf16.gmra.mxu0 %v648
  %v1245 = vpop.f32.mrf.mxu0
  %v1246 = vadd.f32 %v752, %v1245
  %v1247 = vpop.f32.mrf.mxu0
  %1248 = vdwg.mxu0
  %1249 = vmatpush.bf16.msra.mxu0 %v1074
  %1250 = vmatpush.bf16.msra.mxu0 %v1072
  %1251 = vmatpush.bf16.msra.mxu0 %v1070
  %1252 = vmatpush.bf16.msra.mxu0 %v1068
  %1253 = vmatpush.bf16.msra.mxu0 %v1066
  %1254 = vmatpush.bf16.msra.mxu0 %v1064
  %1255 = vmatpush.bf16.msra.mxu0 %v1062
  %1256 = vmatpush.bf16.msra.mxu0 %v1060
  %1257 = vmatmul.bf16.gmra.mxu0 %v649
  %v1258 = vpop.f32.mrf.mxu0
  %v1259 = vadd.f32 %v1246, %v1258
  %v1260 = vpop.f32.mrf.mxu0
  %1261 = vdwg.mxu0
  %1262 = vmatpush.bf16.msra.mxu0 %v1090
  %1263 = vmatpush.bf16.msra.mxu0 %v1088
  %1264 = vmatpush.bf16.msra.mxu0 %v1086
  %1265 = vmatpush.bf16.msra.mxu0 %v1084
  %1266 = vmatpush.bf16.msra.mxu0 %v1082
  %1267 = vmatpush.bf16.msra.mxu0 %v1080
  %1268 = vmatpush.bf16.msra.mxu0 %v1078
  %1269 = vmatpush.bf16.msra.mxu0 %v1076
  %1270 = vmatmul.bf16.gmra.mxu0 %v650
  %v1271 = vpop.f32.mrf.mxu0
  %v1272 = vadd.f32 %v1259, %v1271
  %v1273 = vpop.f32.mrf.mxu0
  %1274 = vdwg.mxu0
  %1275 = vmatpush.bf16.msra.mxu0 %v1106
  %1276 = vmatpush.bf16.msra.mxu0 %v1104
  %1277 = vmatpush.bf16.msra.mxu0 %v1102
  %1278 = vmatpush.bf16.msra.mxu0 %v1100
  %1279 = vmatpush.bf16.msra.mxu0 %v1098
  %1280 = vmatpush.bf16.msra.mxu0 %v1096
  %1281 = vmatpush.bf16.msra.mxu0 %v1094
  %1282 = vmatpush.bf16.msra.mxu0 %v1092
  %1283 = vmatmul.bf16.gmra.mxu0 %v651
  %v1284 = vpop.f32.mrf.mxu0
  %v1285 = vadd.f32 %v1272, %v1284
  %v1286 = vpop.f32.mrf.mxu0
  %1287 = vdwg.mxu0
  %1288 = vmatpush.bf16.msra.mxu0 %v1122
  %1289 = vmatpush.bf16.msra.mxu0 %v1120
  %1290 = vmatpush.bf16.msra.mxu0 %v1118
  %1291 = vmatpush.bf16.msra.mxu0 %v1116
  %1292 = vmatpush.bf16.msra.mxu0 %v1114
  %1293 = vmatpush.bf16.msra.mxu0 %v1112
  %1294 = vmatpush.bf16.msra.mxu0 %v1110
  %1295 = vmatpush.bf16.msra.mxu0 %v1108
  %1296 = vmatmul.bf16.gmra.mxu0 %v652
  %v1297 = vpop.f32.mrf.mxu0
  %v1298 = vadd.f32 %v1285, %v1297
  %v1299 = vpop.f32.mrf.mxu0
  %1300 = vdwg.mxu0
  %1301 = vmatpush.bf16.msra.mxu0 %v1138
  %1302 = vmatpush.bf16.msra.mxu0 %v1136
  %1303 = vmatpush.bf16.msra.mxu0 %v1134
  %1304 = vmatpush.bf16.msra.mxu0 %v1132
  %1305 = vmatpush.bf16.msra.mxu0 %v1130
  %1306 = vmatpush.bf16.msra.mxu0 %v1128
  %1307 = vmatpush.bf16.msra.mxu0 %v1126
  %1308 = vmatpush.bf16.msra.mxu0 %v1124
  %1309 = vmatmul.bf16.gmra.mxu0 %v653
  %v1310 = vpop.f32.mrf.mxu0
  %v1311 = vadd.f32 %v1298, %v1310
  %v1312 = vpop.f32.mrf.mxu0
  %1313 = vdwg.mxu0
  %1314 = vmatpush.bf16.msra.mxu0 %v1059
  %1315 = vmatpush.bf16.msra.mxu0 %v1057
  %1316 = vmatpush.bf16.msra.mxu0 %v1055
  %1317 = vmatpush.bf16.msra.mxu0 %v1053
  %1318 = vmatpush.bf16.msra.mxu0 %v1051
  %1319 = vmatpush.bf16.msra.mxu0 %v1049
  %1320 = vmatpush.bf16.msra.mxu0 %v1047
  %1321 = vmatpush.bf16.msra.mxu0 %v1045
  %1322 = vmatmul.bf16.gmra.mxu0 %v648
  %v1323 = vpop.f32.mrf.mxu0
  %v1324 = vadd.f32 %v753, %v1323
  %v1325 = vpop.f32.mrf.mxu0
  %1326 = vdwg.mxu0
  %1327 = vmatpush.bf16.msra.mxu0 %v1075
  %1328 = vmatpush.bf16.msra.mxu0 %v1073
  %1329 = vmatpush.bf16.msra.mxu0 %v1071
  %1330 = vmatpush.bf16.msra.mxu0 %v1069
  %1331 = vmatpush.bf16.msra.mxu0 %v1067
  %1332 = vmatpush.bf16.msra.mxu0 %v1065
  %1333 = vmatpush.bf16.msra.mxu0 %v1063
  %1334 = vmatpush.bf16.msra.mxu0 %v1061
  %1335 = vmatmul.bf16.gmra.mxu0 %v649
  %v1336 = vpop.f32.mrf.mxu0
  %v1337 = vadd.f32 %v1324, %v1336
  %v1338 = vpop.f32.mrf.mxu0
  %1339 = vdwg.mxu0
  %1340 = vmatpush.bf16.msra.mxu0 %v1091
  %1341 = vmatpush.bf16.msra.mxu0 %v1089
  %1342 = vmatpush.bf16.msra.mxu0 %v1087
  %1343 = vmatpush.bf16.msra.mxu0 %v1085
  %1344 = vmatpush.bf16.msra.mxu0 %v1083
  %1345 = vmatpush.bf16.msra.mxu0 %v1081
  %1346 = vmatpush.bf16.msra.mxu0 %v1079
  %1347 = vmatpush.bf16.msra.mxu0 %v1077
  %1348 = vmatmul.bf16.gmra.mxu0 %v650
  %v1349 = vpop.f32.mrf.mxu0
  %v1350 = vadd.f32 %v1337, %v1349
  %v1351 = vpop.f32.mrf.mxu0
  %1352 = vdwg.mxu0
  %1353 = vmatpush.bf16.msra.mxu0 %v1107
  %1354 = vmatpush.bf16.msra.mxu0 %v1105
  %1355 = vmatpush.bf16.msra.mxu0 %v1103
  %1356 = vmatpush.bf16.msra.mxu0 %v1101
  %1357 = vmatpush.bf16.msra.mxu0 %v1099
  %1358 = vmatpush.bf16.msra.mxu0 %v1097
  %1359 = vmatpush.bf16.msra.mxu0 %v1095
  %1360 = vmatpush.bf16.msra.mxu0 %v1093
  %1361 = vmatmul.bf16.gmra.mxu0 %v651
  %v1362 = vpop.f32.mrf.mxu0
  %v1363 = vadd.f32 %v1350, %v1362
  %v1364 = vpop.f32.mrf.mxu0
  %1365 = vdwg.mxu0
  %1366 = vmatpush.bf16.msra.mxu0 %v1123
  %1367 = vmatpush.bf16.msra.mxu0 %v1121
  %1368 = vmatpush.bf16.msra.mxu0 %v1119
  %1369 = vmatpush.bf16.msra.mxu0 %v1117
  %1370 = vmatpush.bf16.msra.mxu0 %v1115
  %1371 = vmatpush.bf16.msra.mxu0 %v1113
  %1372 = vmatpush.bf16.msra.mxu0 %v1111
  %1373 = vmatpush.bf16.msra.mxu0 %v1109
  %1374 = vmatmul.bf16.gmra.mxu0 %v652
  %v1375 = vpop.f32.mrf.mxu0
  %v1376 = vadd.f32 %v1363, %v1375
  %v1377 = vpop.f32.mrf.mxu0
  %1378 = vdwg.mxu0
  %1379 = vmatpush.bf16.msra.mxu0 %v1139
  %1380 = vmatpush.bf16.msra.mxu0 %v1137
  %1381 = vmatpush.bf16.msra.mxu0 %v1135
  %1382 = vmatpush.bf16.msra.mxu0 %v1133
  %1383 = vmatpush.bf16.msra.mxu0 %v1131
  %1384 = vmatpush.bf16.msra.mxu0 %v1129
  %1385 = vmatpush.bf16.msra.mxu0 %v1127
  %1386 = vmatpush.bf16.msra.mxu0 %v1125
  %1387 = vmatmul.bf16.gmra.mxu0 %v653
  %v1388 = vpop.f32.mrf.mxu0
  %v1389 = vadd.f32 %v1376, %v1388
  %v1390 = vpop.f32.mrf.mxu0
  %1391 = vdwg.mxu0
  %s1392 = smul.u32 0, 8
  %s1393 = sshra.s32 %s1392, 3
  %s1394 = sand.u32 %s1392, 7
  %s1395 = smul.u32 %s1393, 2
  %s1396 = smul.addr %s1395, 8
  %s1397 = scalar_lea.vmem [#allocation2], %s1396
  %1398 = vst [vmem:[%s1397] sm:$0xff] %v1311
  %1399 = vst [vmem:[%s1397 + $0x8] sm:$0xff] %v1389
  %p1400 = scmp.eq.s32.totalorder 0, 0
  // Predicated region
  $region38: #{transda_forward.1} parent=0 // pred_check
    %p1401 = pneg %p1400
  $region39: #{transda_forward.1} parent=0 // pred_check_branch
    %1403 = sbr.rel (%p1401) target = $region41
  $region40: #{transda_forward.1} parent=0 // pred_region
    %v1404 = vld [vmem:[#allocation2] sm:$0xff]
    %v1405 = vld [vmem:[#allocation2 + $0x8] sm:$0xff]
    %v1406 = vlaneseq
    %v1407 = vshrl.u32 %v1406, 7
    %vm1408 = vcmp.lt.s32.totalorder %v1407, 2
    %v1409 = vsel %vm1408, 1, 0
    %v1410 = vcvt.s32.f32 %v1409
    %v1411 = vmul.f32 %v1404, %v1410
    %v1412 = vmul.f32 %v1405, %v1410
    %v1413 = vrot.slane %v1411, 4
    %v1414 = vadd.f32 %v1411, %v1413
    %v1415 = vrot.slane %v1414, 2
    %v1416 = vadd.f32 %v1414, %v1415
    %v1417 = vrot.slane %v1416, 1
    %v1418 = vadd.f32 %v1416, %v1417
    %v1419 = vrot.slane %v1412, 4
    %v1420 = vadd.f32 %v1412, %v1419
    %v1421 = vrot.slane %v1420, 2
    %v1422 = vadd.f32 %v1420, %v1421
    %v1423 = vrot.slane %v1422, 1
    %v1424 = vadd.f32 %v1422, %v1423
    %v1425 = vmul.f32 %v1418, 0.5
    %v1426 = vmul.f32 %v1424, 0.5
    %v1427 = vsub.f32 %v1404, %v1425
    %v1428 = vsub.f32 %v1405, %v1426
    %v1429 = vmul.f32 %v1427, %v1410
    %v1430 = vmul.f32 %v1428, %v1410
    %v1431 = vmul.f32 %v1429, %v1429
    %v1432 = vmul.f32 %v1430, %v1430
    %v1433 = vrot.slane %v1431, 4
    %v1434 = vadd.f32 %v1431, %v1433
    %v1435 = vrot.slane %v1434, 2
    %v1436 = vadd.f32 %v1434, %v1435
    %v1437 = vrot.slane %v1436, 1
    %v1438 = vadd.f32 %v1436, %v1437
    %v1439 = vrot.slane %v1432, 4
    %v1440 = vadd.f32 %v1432, %v1439
    %v1441 = vrot.slane %v1440, 2
    %v1442 = vadd.f32 %v1440, %v1441
    %v1443 = vrot.slane %v1442, 1
    %v1444 = vadd.f32 %v1442, %v1443
    %v1445 = vmul.f32 %v1438, 0.5
    %v1446 = vmul.f32 %v1444, 0.5
    %v1447 = vadd.f32 %v1445, 1e-05
    %v1448 = vadd.f32 %v1446, 1e-05
    %v1449 = vrsqrt.pop %v1447
    %v1450 = vmul.f32 %v1449, %v1447
    %v1451 = vmul.f32 %v1450, %v1449
    %v1452 = vmul.f32 0.5, %v1451
    %v1453 = vsub.f32 1.5, %v1452
    %v1454 = vmul.f32 %v1449, %v1453
    %vm1455 = vweird.f32 %v1447
    %vm1456 = vweird.f32 %v1449
    %vm1457 = vmor %vm1455, %vm1456
    %v1458 = vsel %vm1457, %v1449, %v1454
    %v1459 = vrsqrt.pop %v1448
    %v1460 = vmul.f32 %v1459, %v1448
    %v1461 = vmul.f32 %v1460, %v1459
    %v1462 = vmul.f32 0.5, %v1461
    %v1463 = vsub.f32 1.5, %v1462
    %v1464 = vmul.f32 %v1459, %v1463
    %vm1465 = vweird.f32 %v1448
    %vm1466 = vweird.f32 %v1459
    %vm1467 = vmor %vm1465, %vm1466
    %v1468 = vsel %vm1467, %v1459, %v1464
    %v1469 = vmul.f32 %v1427, %v1458
    %v1470 = vmul.f32 %v1428, %v1468
    %v1471 = vld [vmem:[%s5] sm:$0x3]
    %v1473 = vperm.slane %v1471, 0
    %v1474 = vperm.slane %v1471, 1
    %v1477 = vmul.f32 %v1469, %v1473
    %v1478 = vmul.f32 %v1470, %v1474
    %v1479 = vld [vmem:[%s6] sm:$0x3]
    %v1481 = vperm.slane %v1479, 0
    %v1482 = vperm.slane %v1479, 1
    %v1485 = vadd.f32 %v1477, %v1481
    %v1486 = vadd.f32 %v1478, %v1482
    %1487 = vst [vmem:[%s9] sm:$0xff] %v1485
    %1488 = vst [vmem:[%s9 + $0x8] sm:$0xff] %v1486
    %v1489 = vpack.c.bf16 %v1485, %v1485
    %v1490 = vpack.c.bf16 %v1486, %v1486
    %v1491 = vld [vmem:[%s7] sm:$0xf]
    %v1492 = vld [vmem:[%s7 + $0x4] sm:$0xf]
    %v1493 = vld [vmem:[%s7 + $0x8] sm:$0xf]
    %v1494 = vld [vmem:[%s7 + $0xc] sm:$0xf]
    %v1495 = vld [vmem:[%s7 + $0x10] sm:$0xf]
    %v1496 = vld [vmem:[%s7 + $0x14] sm:$0xf]
    %v1497 = vld [vmem:[%s7 + $0x18] sm:$0xf]
    %v1498 = vld [vmem:[%s7 + $0x1c] sm:$0xf]
    %v1499 = vld [vmem:[%s7 + $0x20] sm:$0xf]
    %v1500 = vld [vmem:[%s7 + $0x24] sm:$0xf]
    %v1501 = vld [vmem:[%s7 + $0x28] sm:$0xf]
    %v1502 = vld [vmem:[%s7 + $0x2c] sm:$0xf]
    %v1503 = vld [vmem:[%s7 + $0x30] sm:$0xf]
    %v1504 = vld [vmem:[%s7 + $0x34] sm:$0xf]
    %v1505 = vld [vmem:[%s7 + $0x38] sm:$0xf]
    %v1506 = vld [vmem:[%s7 + $0x3c] sm:$0xf]
    %v1507 = vld [vmem:[%s7 + $0x40] sm:$0xf]
    %v1508 = vld [vmem:[%s7 + $0x44] sm:$0xf]
    %v1509 = vld [vmem:[%s7 + $0x48] sm:$0xf]
    %v1510 = vld [vmem:[%s7 + $0x4c] sm:$0xf]
    %v1511 = vld [vmem:[%s7 + $0x50] sm:$0xf]
    %v1512 = vld [vmem:[%s7 + $0x54] sm:$0xf]
    %v1513 = vld [vmem:[%s7 + $0x58] sm:$0xf]
    %v1514 = vld [vmem:[%s7 + $0x5c] sm:$0xf]
    %v1515 = vld [vmem:[%s7 + $0x60] sm:$0xf]
    %v1516 = vld [vmem:[%s7 + $0x64] sm:$0xf]
    %v1517 = vld [vmem:[%s7 + $0x68] sm:$0xf]
    %v1518 = vld [vmem:[%s7 + $0x6c] sm:$0xf]
    %v1519 = vld [vmem:[%s7 + $0x70] sm:$0xf]
    %v1520 = vld [vmem:[%s7 + $0x74] sm:$0xf]
    %v1521 = vld [vmem:[%s7 + $0x78] sm:$0xf]
    %v1522 = vld [vmem:[%s7 + $0x7c] sm:$0xf]
    %v1523 = vld [vmem:[%s8] sm:$0x1]
    %v1525 = vperm.slane %v1523, 0
    %v1559 = vunpack.c.l.b16 %v1491
    %v1560 = vunpack.c.l.b16 %v1492
    %v1561 = vunpack.c.l.b16 %v1493
    %v1562 = vunpack.c.l.b16 %v1494
    %v1563 = vunpack.c.l.b16 %v1495
    %v1564 = vunpack.c.l.b16 %v1496
    %v1565 = vunpack.c.l.b16 %v1497
    %v1566 = vunpack.c.l.b16 %v1498
    %v1567 = vunpack.c.l.b16 %v1499
    %v1568 = vunpack.c.l.b16 %v1500
    %v1569 = vunpack.c.l.b16 %v1501
    %v1570 = vunpack.c.l.b16 %v1502
    %v1571 = vunpack.c.l.b16 %v1503
    %v1572 = vunpack.c.l.b16 %v1504
    %v1573 = vunpack.c.l.b16 %v1505
    %v1574 = vunpack.c.l.b16 %v1506
    %v1575 = vunpack.c.l.b16 %v1507
    %v1576 = vunpack.c.l.b16 %v1508
    %v1577 = vunpack.c.l.b16 %v1509
    %v1578 = vunpack.c.l.b16 %v1510
    %v1579 = vunpack.c.l.b16 %v1511
    %v1580 = vunpack.c.l.b16 %v1512
    %v1581 = vunpack.c.l.b16 %v1513
    %v1582 = vunpack.c.l.b16 %v1514
    %v1583 = vunpack.c.l.b16 %v1515
    %v1584 = vunpack.c.l.b16 %v1516
    %v1585 = vunpack.c.l.b16 %v1517
    %v1586 = vunpack.c.l.b16 %v1518
    %v1587 = vunpack.c.l.b16 %v1519
    %v1588 = vunpack.c.l.b16 %v1520
    %v1589 = vunpack.c.l.b16 %v1521
    %v1590 = vunpack.c.l.b16 %v1522
    %v1591 = vpack.c.b16 %v1560, %v1559
    %v1592 = vpack.c.b16 %v1562, %v1561
    %v1593 = vpack.c.b16 %v1564, %v1563
    %v1594 = vpack.c.b16 %v1566, %v1565
    %v1595 = vpack.c.b16 %v1568, %v1567
    %v1596 = vpack.c.b16 %v1570, %v1569
    %v1597 = vpack.c.b16 %v1572, %v1571
    %v1598 = vpack.c.b16 %v1574, %v1573
    %v1599 = vpack.c.b16 %v1576, %v1575
    %v1600 = vpack.c.b16 %v1578, %v1577
    %v1601 = vpack.c.b16 %v1580, %v1579
    %v1602 = vpack.c.b16 %v1582, %v1581
    %v1603 = vpack.c.b16 %v1584, %v1583
    %v1604 = vpack.c.b16 %v1586, %v1585
    %v1605 = vpack.c.b16 %v1588, %v1587
    %v1606 = vpack.c.b16 %v1590, %v1589
    %1623 = vmatpush.bf16.msra.mxu0 %v1598
    %1624 = vmatpush.bf16.msra.mxu0 %v1597
    %1625 = vmatpush.bf16.msra.mxu0 %v1596
    %1626 = vmatpush.bf16.msra.mxu0 %v1595
    %1627 = vmatpush.bf16.msra.mxu0 %v1594
    %1628 = vmatpush.bf16.msra.mxu0 %v1593
    %1629 = vmatpush.bf16.msra.mxu0 %v1592
    %1630 = vmatpush.bf16.msra.mxu0 %v1591
    %1631 = vmatmul.bf16.gmra.mxu0 %v1489
    %v1632 = vpop.f32.mrf.mxu0
    %v1633 = vadd.f32 %v1525, %v1632
    %v1634 = vpop.f32.mrf.mxu0
    %1635 = vdwg.mxu0
    %1636 = vmatpush.bf16.msra.mxu0 %v1606
    %1637 = vmatpush.bf16.msra.mxu0 %v1605
    %1638 = vmatpush.bf16.msra.mxu0 %v1604
    %1639 = vmatpush.bf16.msra.mxu0 %v1603
    %1640 = vmatpush.bf16.msra.mxu0 %v1602
    %1641 = vmatpush.bf16.msra.mxu0 %v1601
    %1642 = vmatpush.bf16.msra.mxu0 %v1600
    %1643 = vmatpush.bf16.msra.mxu0 %v1599
    %1644 = vmatmul.bf16.gmra.mxu0 %v1490
    %v1645 = vpop.f32.mrf.mxu0
    %v1646 = vadd.f32 %v1633, %v1645
    %v1647 = vpop.f32.mrf.mxu0
    %1648 = vdwg.mxu0
    %1649 = vst [vmem:[%s10] sm:$0xff] %v1646
  $region41: #{transda_forward.1} parent=0 // pred_fallthru
    _
  // Predicated region
  $region42: #{transda_forward.1} parent=0 // pred_check
    _
  $region43: #{transda_forward.1} parent=0 // pred_check_branch
    %1651 = sbr.rel (0) target = $region45
  $region44: #{transda_forward.1} parent=0 // pred_region
    _
  $region45: #{transda_forward.1} parent=0 // pred_fallthru
    _
  // Predicated region
  $region46: #{transda_forward.1} parent=0 // pred_check
    _
  $region47: #{transda_forward.1} parent=0 // pred_check_branch
    %1653 = sbr.rel (0) target = $region49
  $region48: #{transda_forward.1} parent=0 // pred_region
    _
  $region49: #{transda_forward.1} parent=0 // pred_fallthru
    _
  // Predicated region
  $region50: #{transda_forward.1} parent=0 // pred_check
    _
  $region51: #{transda_forward.1} parent=0 // pred_check_branch
    %1655 = sbr.rel (0) target = $region53
  $region52: #{transda_forward.1} parent=0 // pred_region
    _
  $region53: #{transda_forward.1} parent=0 // pred_fallthru
    _
  // Predicated region
  $region54: #{transda_forward.1} parent=0 // pred_check
    _
  $region55: #{transda_forward.1} parent=0 // pred_check_branch
    %1657 = sbr.rel (0) target = $region57
  $region56: #{transda_forward.1} parent=0 // pred_region
    _
  $region57: #{transda_forward.1} parent=0 // pred_fallthru
    _

</llo_original>
